<compile_context>
chip_gen: v7x
topology: tpu7x:2x2x1
jax: 0.10.0
libtpu: 0.0.40
codegen_flags: <defaults>
</compile_context>

<pallas_src>
import numpy as np
import jax
import jax.numpy as jnp
from jax import lax
from jax.experimental import pallas as pl
from jax.experimental.pallas import tpu as pltpu


# ----------------------------- Pallas kernel --------------------------------
def textrnn_kernel(x_ref, wih_f_ref, whh_f_ref, b_f_ref,
                   wih_b_ref, b_b_ref, wf_ref, wb_ref, bfc_ref, out_ref):
    """x_ref    : (T, Bb, E)  bf16  embedded tokens, time-major
       wih_f_ref: (E, 4H)     bf16  fwd input weights (pre-transposed, [i,f,o,g])
       whh_f_ref: (H, 4H)     bf16  fwd recurrent weights (pre-transposed, [i,f,o,g])
       b_f_ref  : (1, 4H)     f32   fwd bias (b_ih + b_hh, permuted)
       wih_b_ref: (E, 4H)     bf16  reverse-direction input weights
       b_b_ref  : (1, 4H)     f32   reverse-direction bias
       wf_ref   : (H, C_pad)  bf16  fc weight, forward half, lane-padded
       wb_ref   : (H, C_pad)  bf16  fc weight, backward half, lane-padded
       bfc_ref  : (1, C_pad)  f32   fc bias, lane-padded
       out_ref  : (Bb, C_pad) f32   logits (padded; wrapper slices to C)
    """
    T, Bb, E = x_ref.shape
    G = whh_f_ref.shape[1]
    H = G // 4

    wih_f = wih_f_ref[...]          # (E, 4H) bf16, VMEM-resident for all steps
    whh_f = whh_f_ref[...]          # (H, 4H) bf16
    b_f = b_f_ref[...]              # (1, 4H) f32

    def cell(g, c_prev):
        # gate order [i, f, o, g]: one contiguous sigmoid slab + one tanh slab (EUP)
        ifo = jax.nn.sigmoid(g[:, : 3 * H])
        gg = jnp.tanh(g[:, 3 * H:])
        i = ifo[:, 0 * H:1 * H]
        f = ifo[:, 1 * H:2 * H]
        o = ifo[:, 2 * H:3 * H]
        c = f * c_prev + i * gg
        h = o * jnp.tanh(c)
        return h, c

    def step(x_t, h, c):
        # x_t @ Wih is h-independent -> MXU work off the serial chain;
        # only h @ Whh sits on the latency-critical recurrence.
        g = (jnp.dot(x_t, wih_f, preferred_element_type=jnp.float32)
             + jnp.dot(h.astype(jnp.bfloat16), whh_f,
                       preferred_element_type=jnp.float32)
             + b_f)
        return cell(g, c)

    # ---- forward recurrence (h/c state kept in f32) ----
    g0 = jnp.dot(x_ref[0], wih_f, preferred_element_type=jnp.float32) + b_f
    h, c = cell(g0, jnp.zeros((Bb, H), jnp.float32))        # h0 = 0 -> no h@Whh term
    if T <= 16:
        # T is small & static: full unroll for LLO scheduling visibility.
        for t in range(1, T):
            h, c = step(x_ref[t], h, c)
    else:
        # Long sequences: bounded code size / vreg pressure.
        def body(t, carry):
            h_, c_ = carry
            return step(x_ref[t], h_, c_)
        h, c = lax.fori_loop(1, T, body, (h, c), unroll=4)

    # ---- reverse direction ----
    # NOTE: the model only reads output[:, -1, :] of a batch_first bidirectional
    # LSTM; its reverse half at t = T-1 is the reverse LSTM's FIRST step, i.e.
    # one cell update on x_{T-1} from the zero state.  This shortcut is ONLY
    # valid for the last timestep (no pooling / other timesteps / init state).
    g_b = (jnp.dot(x_ref[T - 1], wih_b_ref[...], preferred_element_type=jnp.float32)
           + b_b_ref[...])
    h_b, _ = cell(g_b, jnp.zeros((Bb, H), jnp.float32))

    # ---- classifier (Dropout is eval-mode identity) ----
    # TODO(synk): add masked dropout (pltpu.prng_*) if training-mode support is needed.
    logits = (jnp.dot(h.astype(jnp.bfloat16), wf_ref[...],
                      preferred_element_type=jnp.float32)
              + jnp.dot(h_b.astype(jnp.bfloat16), wb_ref[...],
                        preferred_element_type=jnp.float32)
              + bfc_ref[...])
    out_ref[...] = logits.astype(out_ref.dtype)


# ------------------------------- wrapper -------------------------------------
def _pick_block_b(B, T, E, C_pad):
    """Batch tile: divides B, sublane-aligned when partial, >= 2 grid blocks when
    the batch allows (v7x has 2 TensorCores), and double-buffered streamed blocks
    stay within a 32 MiB VMEM budget (safe on v7x's 64 MiB physical VMEM)."""
    if B < 16 or B % 8 != 0:
        return B                                     # tiny batches: single block
    budget = 32 << 20
    bb = min(256, B // 2)                            # target 128-256 rows, nb >= 2
    bb -= bb % 8
    while bb >= 8:
        x_blk = T * bb * E * 2                       # bf16 streamed input, per buffer
        out_blk = bb * C_pad * 4                     # f32 logits, per buffer
        if B % bb == 0 and 2 * (x_blk + out_blk) <= budget:
            return bb
        bb -= 8
    return B


def textrnn_forward(tokens, params, *, block_b=None):
    """tokens: (B, T) int32.  Returns logits (B, num_classes) float32."""
    emb = params["embedding"]                        # (V, E)
    B, T = tokens.shape
    E = emb.shape[1]
    H = params["whh_f"].shape[1]
    C = params["fc_b"].shape[-1]
    C_pad = ((C + 127) // 128) * 128                 # lane-dense output width

    # TODO(synk): fuse the embedding gather into the pallas_call (scalar-prefetch
    # tokens + in-kernel VMEM/DMA gather); kept wrapper-side for lowering robustness.
    x = jnp.take(emb, tokens, axis=0).astype(jnp.bfloat16)   # (B, T, E)
    x = jnp.transpose(x, (1, 0, 2))                          # (T, B, E) time-major

    if block_b is None:
        block_b = _pick_block_b(B, T, E, C_pad)
    assert B % block_b == 0, "batch must be divisible by block_b"
    assert block_b == B or block_b % 8 == 0, "partial batch blocks must be sublane-aligned"

    # Gate-row permutation: PyTorch [i, f, g, o]  ->  [i, f, o, g]
    perm = jnp.concatenate([jnp.arange(0, H), jnp.arange(H, 2 * H),
                            jnp.arange(3 * H, 4 * H), jnp.arange(2 * H, 3 * H)])

    # Pre-transpose to (K, N), permute gate rows, cast MXU operands to bf16.
    # b_f / b_b must already be (b_ih + b_hh); sum them first if importing raw
    # PyTorch state_dicts.
    wih_f = params["wih_f"][perm].T.astype(jnp.bfloat16)     # (E, 4H)
    whh_f = params["whh_f"][perm].T.astype(jnp.bfloat16)     # (H, 4H)
    b_f = params["b_f"][:, perm].astype(jnp.float32)         # (1, 4H)
    wih_b = params["wih_b"][perm].T.astype(jnp.bfloat16)     # (E, 4H)
    b_b = params["b_b"][:, perm].astype(jnp.float32)         # (1, 4H)

    # Split + lane-pad the classifier (no in-kernel concat, dense 128-wide stores).
    fc_w = params["fc_w"]                                    # (C, 2H)
    fc_wf = jnp.zeros((H, C_pad), jnp.bfloat16).at[:, :C].set(
        fc_w[:, :H].T.astype(jnp.bfloat16))
    fc_wb = jnp.zeros((H, C_pad), jnp.bfloat16).at[:, :C].set(
        fc_w[:, H:].T.astype(jnp.bfloat16))
    fc_b = jnp.zeros((1, C_pad), jnp.float32).at[:, :C].set(params["fc_b"])

    nb = B // block_b

    # VMEM budget: double-buffered streamed blocks + (default double-buffered)
    # grid-invariant weights.  (When H/C grow, the weight specs could drop to
    # single-buffering via pipeline_mode=pl.Buffered(1) to free headroom.)
    stream_bytes = 2 * (T * block_b * E * 2 + block_b * C_pad * 4)
    weight_bytes = 2 * ((wih_f.size + whh_f.size + wih_b.size
                         + fc_wf.size + fc_wb.size) * 2
                        + (b_f.size + b_b.size + fc_b.size) * 4)
    vmem_limit = int(min(max(2 * stream_bytes + weight_bytes + (2 << 20),
                             8 << 20), 64 << 20))

    out_pad = pl.pallas_call(
        textrnn_kernel,
        out_shape=jax.ShapeDtypeStruct((B, C_pad), jnp.float32),
        grid=(nb,),
        in_specs=[
            pl.BlockSpec((T, block_b, E), lambda i: (0, i, 0)),   # x (streamed)
            pl.BlockSpec((E, 4 * H), lambda i: (0, 0)),           # wih_f
            pl.BlockSpec((H, 4 * H), lambda i: (0, 0)),           # whh_f
            pl.BlockSpec((1, 4 * H), lambda i: (0, 0)),           # b_f
            pl.BlockSpec((E, 4 * H), lambda i: (0, 0)),           # wih_b
            pl.BlockSpec((1, 4 * H), lambda i: (0, 0)),           # b_b
            pl.BlockSpec((H, C_pad), lambda i: (0, 0)),           # fc_wf
            pl.BlockSpec((H, C_pad), lambda i: (0, 0)),           # fc_wb
            pl.BlockSpec((1, C_pad), lambda i: (0, 0)),           # fc_b
        ],
        out_specs=pl.BlockSpec((block_b, C_pad), lambda i: (i, 0)),
        compiler_params=pltpu.CompilerParams(
            dimension_semantics=("parallel",),
            vmem_limit_bytes=vmem_limit),
    )(x, wih_f, whh_f, b_f, wih_b, b_b, fc_wf, fc_wb, fc_b)

    return out_pad[:, :C]


# --------------------------- pure-JAX reference -------------------------------
def textrnn_reference(tokens, params):
    x = jnp.take(params["embedding"], tokens, axis=0)   # (B, T, E) f32
    B, T, E = x.shape
    H = params["whh_f"].shape[1]

    def cell(g, c_prev):
        i = jax.nn.sigmoid(g[:, 0 * H:1 * H])
        f = jax.nn.sigmoid(g[:, 1 * H:2 * H])
        gg = jnp.tanh(g[:, 2 * H:3 * H])
        o = jax.nn.sigmoid(g[:, 3 * H:4 * H])
        c = f * c_prev + i * gg
        return o * jnp.tanh(c), c

    def run(xs, wih, whh, b):
        def step(carry, x_t):
            h, c = carry
            g = x_t @ wih.T + h @ whh.T + b
            h, c = cell(g, c)
            return (h, c), h
        (_, _), hs = lax.scan(step, (jnp.zeros((B, H)), jnp.zeros((B, H))),
                              jnp.swapaxes(xs, 0, 1))
        return jnp.swapaxes(hs, 0, 1)                   # (B, T, H)

    out_f = run(x, params["wih_f"], params["whh_f"], params["b_f"])
    out_b = run(x[:, ::-1, :], params["wih_b"], params["whh_b"], params["b_b"])[:, ::-1, :]
    out = jnp.concatenate([out_f, out_b], axis=-1)      # (B, T, 2H)
    last = out[:, -1, :]
    return last @ params["fc_w"].T + params["fc_b"]


# --------------------------------- main ---------------------------------------
if __name__ == "__main__":
    vocab_size, embedding_dim, hidden_dim, num_classes = 50, 16, 32, 4
    B, T = 2, 8

    key = jax.random.PRNGKey(0)
    ks = jax.random.split(key, 10)
    k_lstm = 1.0 / np.sqrt(hidden_dim)
    k_fc = 1.0 / np.sqrt(2 * hidden_dim)

    def unif(k, shape, scale):
        return jax.random.uniform(k, shape, jnp.float32, -scale, scale)

    params = {
        "embedding": jax.random.normal(ks[0], (vocab_size, embedding_dim), jnp.float32),
        # forward direction (PyTorch layouts / [i,f,g,o] gate order)
        "wih_f": unif(ks[1], (4 * hidden_dim, embedding_dim), k_lstm),
        "whh_f": unif(ks[2], (4 * hidden_dim, hidden_dim), k_lstm),
        "b_f":   unif(ks[3], (1, 4 * hidden_dim), k_lstm),   # b_ih + b_hh combined
        # reverse direction
        "wih_b": unif(ks[4], (4 * hidden_dim, embedding_dim), k_lstm),
        "whh_b": unif(ks[5], (4 * hidden_dim, hidden_dim), k_lstm),
        "b_b":   unif(ks[6], (1, 4 * hidden_dim), k_lstm),
        # classifier
        "fc_w":  unif(ks[7], (num_classes, 2 * hidden_dim), k_fc),
        "fc_b":  unif(ks[8], (1, num_classes), k_fc),
    }

    tokens = jax.random.randint(ks[9], (B, T), 0, vocab_size, dtype=jnp.int32)

    out = jax.block_until_ready(textrnn_forward(tokens, params))
    ref = jax.block_until_ready(textrnn_reference(tokens, params))

    assert out.shape == (B, num_classes)
    # bf16 MXU operands with f32 accumulation -> relaxed tolerance vs f32 reference.
    np.testing.assert_allclose(np.asarray(out), np.asarray(ref), atol=2e-2, rtol=2e-2)
    print("KERNEL_OK")
</pallas_src>

<mosaic_0001>
module attributes {stable_mosaic.version = 11 : i64} {
  func.func @textrnn_kernel(%arg0: i32, %arg1: memref<8x2x16xbf16, #tpu.memory_space<vmem>>, %arg2: memref<16x128xbf16, #tpu.memory_space<vmem>>, %arg3: memref<32x128xbf16, #tpu.memory_space<vmem>>, %arg4: memref<1x128xf32, #tpu.memory_space<vmem>>, %arg5: memref<16x128xbf16, #tpu.memory_space<vmem>>, %arg6: memref<1x128xf32, #tpu.memory_space<vmem>>, %arg7: memref<32x128xbf16, #tpu.memory_space<vmem>>, %arg8: memref<32x128xbf16, #tpu.memory_space<vmem>>, %arg9: memref<1x128xf32, #tpu.memory_space<vmem>>, %arg10: memref<2x128xf32, #tpu.memory_space<vmem>>) attributes {dimension_semantics = [#tpu.dimension_semantics<parallel>], iteration_bounds = array<i64: 1>, scalar_prefetch = 0 : i64, scratch_operands = 0 : i64, tpu.core_type = #tpu.core_type<tc>, window_params = [{transform_indices = @transform_0, window_bounds = array<i64: 8, 2, 16>}, {pipeline_mode = #tpu.pipeline_mode<synchronous>, transform_indices = @transform_1, window_bounds = array<i64: 16, 128>}, {pipeline_mode = #tpu.pipeline_mode<synchronous>, transform_indices = @transform_2, window_bounds = array<i64: 32, 128>}, {pipeline_mode = #tpu.pipeline_mode<synchronous>, transform_indices = @transform_3, window_bounds = array<i64: 1, 128>}, {pipeline_mode = #tpu.pipeline_mode<synchronous>, transform_indices = @transform_4, window_bounds = array<i64: 16, 128>}, {pipeline_mode = #tpu.pipeline_mode<synchronous>, transform_indices = @transform_5, window_bounds = array<i64: 1, 128>}, {pipeline_mode = #tpu.pipeline_mode<synchronous>, transform_indices = @transform_6, window_bounds = array<i64: 32, 128>}, {pipeline_mode = #tpu.pipeline_mode<synchronous>, transform_indices = @transform_7, window_bounds = array<i64: 32, 128>}, {pipeline_mode = #tpu.pipeline_mode<synchronous>, transform_indices = @transform_8, window_bounds = array<i64: 1, 128>}, {transform_indices = @transform_9, window_bounds = array<i64: 2, 128>}]} {
    %c0 = arith.constant 0 : index
    %c0_0 = arith.constant 0 : index
    %0 = vector.load %arg2[%c0, %c0_0] : memref<16x128xbf16, #tpu.memory_space<vmem>>, vector<16x128xbf16>
    %c0_1 = arith.constant 0 : index
    %c0_2 = arith.constant 0 : index
    %1 = vector.load %arg3[%c0_1, %c0_2] : memref<32x128xbf16, #tpu.memory_space<vmem>>, vector<32x128xbf16>
    %c0_3 = arith.constant 0 : index
    %c0_4 = arith.constant 0 : index
    %2 = vector.load %arg4[%c0_3, %c0_4] : memref<1x128xf32, #tpu.memory_space<vmem>>, vector<1x128xf32>
    %c0_5 = arith.constant 0 : index
    %c0_6 = arith.constant 0 : index
    %c0_7 = arith.constant 0 : index
    %3 = vector.load %arg1[%c0_5, %c0_6, %c0_7] : memref<8x2x16xbf16, #tpu.memory_space<vmem>>, vector<1x2x16xbf16>
    %4 = vector.shape_cast %3 : vector<1x2x16xbf16> to vector<2x16xbf16>
    %cst = arith.constant dense<0.000000e+00> : vector<2x128xf32>
    %5 = tpu.matmul %4, %0, %cst {dimension_numbers = #tpu.dot_dimension_numbers<[1], [0], [0], [1], [0, 0, 1, 1], [], []>} : vector<2x16xbf16>, vector<16x128xbf16>, vector<2x128xf32> -> vector<2x128xf32>
    %6 = vector.broadcast %2 : vector<1x128xf32> to vector<2x128xf32>
    %7 = arith.addf %5, %6 : vector<2x128xf32>
    %cst_8 = arith.constant 0.000000e+00 : f32
    %8 = vector.broadcast %cst_8 : f32 to vector<2x32xf32>
    %9 = vector.extract_strided_slice %7 {offsets = [0, 0], sizes = [2, 96], strides = [1, 1]} : vector<2x128xf32> to vector<2x96xf32>
    %10 = arith.negf %9 : vector<2x96xf32>
    %11 = math.exp %10 : vector<2x96xf32>
    %cst_9 = arith.constant 1.000000e+00 : f32
    %12 = vector.broadcast %cst_9 : f32 to vector<2x96xf32>
    %13 = arith.addf %12, %11 : vector<2x96xf32>
    %14 = arith.divf %12, %13 : vector<2x96xf32>
    %15 = vector.extract_strided_slice %7 {offsets = [0, 96], sizes = [2, 32], strides = [1, 1]} : vector<2x128xf32> to vector<2x32xf32>
    %16 = math.tanh %15 : vector<2x32xf32>
    %17 = vector.extract_strided_slice %14 {offsets = [0, 0], sizes = [2, 32], strides = [1, 1]} : vector<2x96xf32> to vector<2x32xf32>
    %18 = vector.extract_strided_slice %14 {offsets = [0, 32], sizes = [2, 32], strides = [1, 1]} : vector<2x96xf32> to vector<2x32xf32>
    %19 = vector.extract_strided_slice %14 {offsets = [0, 64], sizes = [2, 32], strides = [1, 1]} : vector<2x96xf32> to vector<2x32xf32>
    %20 = arith.mulf %18, %8 : vector<2x32xf32>
    %21 = arith.mulf %17, %16 : vector<2x32xf32>
    %22 = arith.addf %20, %21 : vector<2x32xf32>
    %23 = math.tanh %22 : vector<2x32xf32>
    %24 = arith.mulf %19, %23 : vector<2x32xf32>
    %c1 = arith.constant 1 : index
    %c0_10 = arith.constant 0 : index
    %c0_11 = arith.constant 0 : index
    %25 = vector.load %arg1[%c1, %c0_10, %c0_11] : memref<8x2x16xbf16, #tpu.memory_space<vmem>>, vector<1x2x16xbf16>
    %26 = vector.shape_cast %25 : vector<1x2x16xbf16> to vector<2x16xbf16>
    %cst_12 = arith.constant dense<0.000000e+00> : vector<2x128xf32>
    %27 = tpu.matmul %26, %0, %cst_12 {dimension_numbers = #tpu.dot_dimension_numbers<[1], [0], [0], [1], [0, 0, 1, 1], [], []>} : vector<2x16xbf16>, vector<16x128xbf16>, vector<2x128xf32> -> vector<2x128xf32>
    %28 = arith.truncf %24 : vector<2x32xf32> to vector<2x32xbf16>
    %cst_13 = arith.constant dense<0.000000e+00> : vector<2x128xf32>
    %29 = tpu.matmul %28, %1, %cst_13 {dimension_numbers = #tpu.dot_dimension_numbers<[1], [0], [0], [1], [0, 0, 1, 1], [], []>} : vector<2x32xbf16>, vector<32x128xbf16>, vector<2x128xf32> -> vector<2x128xf32>
    %30 = arith.addf %27, %29 : vector<2x128xf32>
    %31 = vector.broadcast %2 : vector<1x128xf32> to vector<2x128xf32>
    %32 = arith.addf %30, %31 : vector<2x128xf32>
    %33 = vector.extract_strided_slice %32 {offsets = [0, 0], sizes = [2, 96], strides = [1, 1]} : vector<2x128xf32> to vector<2x96xf32>
    %34 = arith.negf %33 : vector<2x96xf32>
    %35 = math.exp %34 : vector<2x96xf32>
    %cst_14 = arith.constant 1.000000e+00 : f32
    %36 = vector.broadcast %cst_14 : f32 to vector<2x96xf32>
    %37 = arith.addf %36, %35 : vector<2x96xf32>
    %38 = arith.divf %36, %37 : vector<2x96xf32>
    %39 = vector.extract_strided_slice %32 {offsets = [0, 96], sizes = [2, 32], strides = [1, 1]} : vector<2x128xf32> to vector<2x32xf32>
    %40 = math.tanh %39 : vector<2x32xf32>
    %41 = vector.extract_strided_slice %38 {offsets = [0, 0], sizes = [2, 32], strides = [1, 1]} : vector<2x96xf32> to vector<2x32xf32>
    %42 = vector.extract_strided_slice %38 {offsets = [0, 32], sizes = [2, 32], strides = [1, 1]} : vector<2x96xf32> to vector<2x32xf32>
    %43 = vector.extract_strided_slice %38 {offsets = [0, 64], sizes = [2, 32], strides = [1, 1]} : vector<2x96xf32> to vector<2x32xf32>
    %44 = arith.mulf %42, %22 : vector<2x32xf32>
    %45 = arith.mulf %41, %40 : vector<2x32xf32>
    %46 = arith.addf %44, %45 : vector<2x32xf32>
    %47 = math.tanh %46 : vector<2x32xf32>
    %48 = arith.mulf %43, %47 : vector<2x32xf32>
    %c2 = arith.constant 2 : index
    %c0_15 = arith.constant 0 : index
    %c0_16 = arith.constant 0 : index
    %49 = vector.load %arg1[%c2, %c0_15, %c0_16] : memref<8x2x16xbf16, #tpu.memory_space<vmem>>, vector<1x2x16xbf16>
    %50 = vector.shape_cast %49 : vector<1x2x16xbf16> to vector<2x16xbf16>
    %cst_17 = arith.constant dense<0.000000e+00> : vector<2x128xf32>
    %51 = tpu.matmul %50, %0, %cst_17 {dimension_numbers = #tpu.dot_dimension_numbers<[1], [0], [0], [1], [0, 0, 1, 1], [], []>} : vector<2x16xbf16>, vector<16x128xbf16>, vector<2x128xf32> -> vector<2x128xf32>
    %52 = arith.truncf %48 : vector<2x32xf32> to vector<2x32xbf16>
    %cst_18 = arith.constant dense<0.000000e+00> : vector<2x128xf32>
    %53 = tpu.matmul %52, %1, %cst_18 {dimension_numbers = #tpu.dot_dimension_numbers<[1], [0], [0], [1], [0, 0, 1, 1], [], []>} : vector<2x32xbf16>, vector<32x128xbf16>, vector<2x128xf32> -> vector<2x128xf32>
    %54 = arith.addf %51, %53 : vector<2x128xf32>
    %55 = vector.broadcast %2 : vector<1x128xf32> to vector<2x128xf32>
    %56 = arith.addf %54, %55 : vector<2x128xf32>
    %57 = vector.extract_strided_slice %56 {offsets = [0, 0], sizes = [2, 96], strides = [1, 1]} : vector<2x128xf32> to vector<2x96xf32>
    %58 = arith.negf %57 : vector<2x96xf32>
    %59 = math.exp %58 : vector<2x96xf32>
    %cst_19 = arith.constant 1.000000e+00 : f32
    %60 = vector.broadcast %cst_19 : f32 to vector<2x96xf32>
    %61 = arith.addf %60, %59 : vector<2x96xf32>
    %62 = arith.divf %60, %61 : vector<2x96xf32>
    %63 = vector.extract_strided_slice %56 {offsets = [0, 96], sizes = [2, 32], strides = [1, 1]} : vector<2x128xf32> to vector<2x32xf32>
    %64 = math.tanh %63 : vector<2x32xf32>
    %65 = vector.extract_strided_slice %62 {offsets = [0, 0], sizes = [2, 32], strides = [1, 1]} : vector<2x96xf32> to vector<2x32xf32>
    %66 = vector.extract_strided_slice %62 {offsets = [0, 32], sizes = [2, 32], strides = [1, 1]} : vector<2x96xf32> to vector<2x32xf32>
    %67 = vector.extract_strided_slice %62 {offsets = [0, 64], sizes = [2, 32], strides = [1, 1]} : vector<2x96xf32> to vector<2x32xf32>
    %68 = arith.mulf %66, %46 : vector<2x32xf32>
    %69 = arith.mulf %65, %64 : vector<2x32xf32>
    %70 = arith.addf %68, %69 : vector<2x32xf32>
    %71 = math.tanh %70 : vector<2x32xf32>
    %72 = arith.mulf %67, %71 : vector<2x32xf32>
    %c3 = arith.constant 3 : index
    %c0_20 = arith.constant 0 : index
    %c0_21 = arith.constant 0 : index
    %73 = vector.load %arg1[%c3, %c0_20, %c0_21] : memref<8x2x16xbf16, #tpu.memory_space<vmem>>, vector<1x2x16xbf16>
    %74 = vector.shape_cast %73 : vector<1x2x16xbf16> to vector<2x16xbf16>
    %cst_22 = arith.constant dense<0.000000e+00> : vector<2x128xf32>
    %75 = tpu.matmul %74, %0, %cst_22 {dimension_numbers = #tpu.dot_dimension_numbers<[1], [0], [0], [1], [0, 0, 1, 1], [], []>} : vector<2x16xbf16>, vector<16x128xbf16>, vector<2x128xf32> -> vector<2x128xf32>
    %76 = arith.truncf %72 : vector<2x32xf32> to vector<2x32xbf16>
    %cst_23 = arith.constant dense<0.000000e+00> : vector<2x128xf32>
    %77 = tpu.matmul %76, %1, %cst_23 {dimension_numbers = #tpu.dot_dimension_numbers<[1], [0], [0], [1], [0, 0, 1, 1], [], []>} : vector<2x32xbf16>, vector<32x128xbf16>, vector<2x128xf32> -> vector<2x128xf32>
    %78 = arith.addf %75, %77 : vector<2x128xf32>
    %79 = vector.broadcast %2 : vector<1x128xf32> to vector<2x128xf32>
    %80 = arith.addf %78, %79 : vector<2x128xf32>
    %81 = vector.extract_strided_slice %80 {offsets = [0, 0], sizes = [2, 96], strides = [1, 1]} : vector<2x128xf32> to vector<2x96xf32>
    %82 = arith.negf %81 : vector<2x96xf32>
    %83 = math.exp %82 : vector<2x96xf32>
    %cst_24 = arith.constant 1.000000e+00 : f32
    %84 = vector.broadcast %cst_24 : f32 to vector<2x96xf32>
    %85 = arith.addf %84, %83 : vector<2x96xf32>
    %86 = arith.divf %84, %85 : vector<2x96xf32>
    %87 = vector.extract_strided_slice %80 {offsets = [0, 96], sizes = [2, 32], strides = [1, 1]} : vector<2x128xf32> to vector<2x32xf32>
    %88 = math.tanh %87 : vector<2x32xf32>
    %89 = vector.extract_strided_slice %86 {offsets = [0, 0], sizes = [2, 32], strides = [1, 1]} : vector<2x96xf32> to vector<2x32xf32>
    %90 = vector.extract_strided_slice %86 {offsets = [0, 32], sizes = [2, 32], strides = [1, 1]} : vector<2x96xf32> to vector<2x32xf32>
    %91 = vector.extract_strided_slice %86 {offsets = [0, 64], sizes = [2, 32], strides = [1, 1]} : vector<2x96xf32> to vector<2x32xf32>
    %92 = arith.mulf %90, %70 : vector<2x32xf32>
    %93 = arith.mulf %89, %88 : vector<2x32xf32>
    %94 = arith.addf %92, %93 : vector<2x32xf32>
    %95 = math.tanh %94 : vector<2x32xf32>
    %96 = arith.mulf %91, %95 : vector<2x32xf32>
    %c4 = arith.constant 4 : index
    %c0_25 = arith.constant 0 : index
    %c0_26 = arith.constant 0 : index
    %97 = vector.load %arg1[%c4, %c0_25, %c0_26] : memref<8x2x16xbf16, #tpu.memory_space<vmem>>, vector<1x2x16xbf16>
    %98 = vector.shape_cast %97 : vector<1x2x16xbf16> to vector<2x16xbf16>
    %cst_27 = arith.constant dense<0.000000e+00> : vector<2x128xf32>
    %99 = tpu.matmul %98, %0, %cst_27 {dimension_numbers = #tpu.dot_dimension_numbers<[1], [0], [0], [1], [0, 0, 1, 1], [], []>} : vector<2x16xbf16>, vector<16x128xbf16>, vector<2x128xf32> -> vector<2x128xf32>
    %100 = arith.truncf %96 : vector<2x32xf32> to vector<2x32xbf16>
    %cst_28 = arith.constant dense<0.000000e+00> : vector<2x128xf32>
    %101 = tpu.matmul %100, %1, %cst_28 {dimension_numbers = #tpu.dot_dimension_numbers<[1], [0], [0], [1], [0, 0, 1, 1], [], []>} : vector<2x32xbf16>, vector<32x128xbf16>, vector<2x128xf32> -> vector<2x128xf32>
    %102 = arith.addf %99, %101 : vector<2x128xf32>
    %103 = vector.broadcast %2 : vector<1x128xf32> to vector<2x128xf32>
    %104 = arith.addf %102, %103 : vector<2x128xf32>
    %105 = vector.extract_strided_slice %104 {offsets = [0, 0], sizes = [2, 96], strides = [1, 1]} : vector<2x128xf32> to vector<2x96xf32>
    %106 = arith.negf %105 : vector<2x96xf32>
    %107 = math.exp %106 : vector<2x96xf32>
    %cst_29 = arith.constant 1.000000e+00 : f32
    %108 = vector.broadcast %cst_29 : f32 to vector<2x96xf32>
    %109 = arith.addf %108, %107 : vector<2x96xf32>
    %110 = arith.divf %108, %109 : vector<2x96xf32>
    %111 = vector.extract_strided_slice %104 {offsets = [0, 96], sizes = [2, 32], strides = [1, 1]} : vector<2x128xf32> to vector<2x32xf32>
    %112 = math.tanh %111 : vector<2x32xf32>
    %113 = vector.extract_strided_slice %110 {offsets = [0, 0], sizes = [2, 32], strides = [1, 1]} : vector<2x96xf32> to vector<2x32xf32>
    %114 = vector.extract_strided_slice %110 {offsets = [0, 32], sizes = [2, 32], strides = [1, 1]} : vector<2x96xf32> to vector<2x32xf32>
    %115 = vector.extract_strided_slice %110 {offsets = [0, 64], sizes = [2, 32], strides = [1, 1]} : vector<2x96xf32> to vector<2x32xf32>
    %116 = arith.mulf %114, %94 : vector<2x32xf32>
    %117 = arith.mulf %113, %112 : vector<2x32xf32>
    %118 = arith.addf %116, %117 : vector<2x32xf32>
    %119 = math.tanh %118 : vector<2x32xf32>
    %120 = arith.mulf %115, %119 : vector<2x32xf32>
    %c5 = arith.constant 5 : index
    %c0_30 = arith.constant 0 : index
    %c0_31 = arith.constant 0 : index
    %121 = vector.load %arg1[%c5, %c0_30, %c0_31] : memref<8x2x16xbf16, #tpu.memory_space<vmem>>, vector<1x2x16xbf16>
    %122 = vector.shape_cast %121 : vector<1x2x16xbf16> to vector<2x16xbf16>
    %cst_32 = arith.constant dense<0.000000e+00> : vector<2x128xf32>
    %123 = tpu.matmul %122, %0, %cst_32 {dimension_numbers = #tpu.dot_dimension_numbers<[1], [0], [0], [1], [0, 0, 1, 1], [], []>} : vector<2x16xbf16>, vector<16x128xbf16>, vector<2x128xf32> -> vector<2x128xf32>
    %124 = arith.truncf %120 : vector<2x32xf32> to vector<2x32xbf16>
    %cst_33 = arith.constant dense<0.000000e+00> : vector<2x128xf32>
    %125 = tpu.matmul %124, %1, %cst_33 {dimension_numbers = #tpu.dot_dimension_numbers<[1], [0], [0], [1], [0, 0, 1, 1], [], []>} : vector<2x32xbf16>, vector<32x128xbf16>, vector<2x128xf32> -> vector<2x128xf32>
    %126 = arith.addf %123, %125 : vector<2x128xf32>
    %127 = vector.broadcast %2 : vector<1x128xf32> to vector<2x128xf32>
    %128 = arith.addf %126, %127 : vector<2x128xf32>
    %129 = vector.extract_strided_slice %128 {offsets = [0, 0], sizes = [2, 96], strides = [1, 1]} : vector<2x128xf32> to vector<2x96xf32>
    %130 = arith.negf %129 : vector<2x96xf32>
    %131 = math.exp %130 : vector<2x96xf32>
    %cst_34 = arith.constant 1.000000e+00 : f32
    %132 = vector.broadcast %cst_34 : f32 to vector<2x96xf32>
    %133 = arith.addf %132, %131 : vector<2x96xf32>
    %134 = arith.divf %132, %133 : vector<2x96xf32>
    %135 = vector.extract_strided_slice %128 {offsets = [0, 96], sizes = [2, 32], strides = [1, 1]} : vector<2x128xf32> to vector<2x32xf32>
    %136 = math.tanh %135 : vector<2x32xf32>
    %137 = vector.extract_strided_slice %134 {offsets = [0, 0], sizes = [2, 32], strides = [1, 1]} : vector<2x96xf32> to vector<2x32xf32>
    %138 = vector.extract_strided_slice %134 {offsets = [0, 32], sizes = [2, 32], strides = [1, 1]} : vector<2x96xf32> to vector<2x32xf32>
    %139 = vector.extract_strided_slice %134 {offsets = [0, 64], sizes = [2, 32], strides = [1, 1]} : vector<2x96xf32> to vector<2x32xf32>
    %140 = arith.mulf %138, %118 : vector<2x32xf32>
    %141 = arith.mulf %137, %136 : vector<2x32xf32>
    %142 = arith.addf %140, %141 : vector<2x32xf32>
    %143 = math.tanh %142 : vector<2x32xf32>
    %144 = arith.mulf %139, %143 : vector<2x32xf32>
    %c6 = arith.constant 6 : index
    %c0_35 = arith.constant 0 : index
    %c0_36 = arith.constant 0 : index
    %145 = vector.load %arg1[%c6, %c0_35, %c0_36] : memref<8x2x16xbf16, #tpu.memory_space<vmem>>, vector<1x2x16xbf16>
    %146 = vector.shape_cast %145 : vector<1x2x16xbf16> to vector<2x16xbf16>
    %cst_37 = arith.constant dense<0.000000e+00> : vector<2x128xf32>
    %147 = tpu.matmul %146, %0, %cst_37 {dimension_numbers = #tpu.dot_dimension_numbers<[1], [0], [0], [1], [0, 0, 1, 1], [], []>} : vector<2x16xbf16>, vector<16x128xbf16>, vector<2x128xf32> -> vector<2x128xf32>
    %148 = arith.truncf %144 : vector<2x32xf32> to vector<2x32xbf16>
    %cst_38 = arith.constant dense<0.000000e+00> : vector<2x128xf32>
    %149 = tpu.matmul %148, %1, %cst_38 {dimension_numbers = #tpu.dot_dimension_numbers<[1], [0], [0], [1], [0, 0, 1, 1], [], []>} : vector<2x32xbf16>, vector<32x128xbf16>, vector<2x128xf32> -> vector<2x128xf32>
    %150 = arith.addf %147, %149 : vector<2x128xf32>
    %151 = vector.broadcast %2 : vector<1x128xf32> to vector<2x128xf32>
    %152 = arith.addf %150, %151 : vector<2x128xf32>
    %153 = vector.extract_strided_slice %152 {offsets = [0, 0], sizes = [2, 96], strides = [1, 1]} : vector<2x128xf32> to vector<2x96xf32>
    %154 = arith.negf %153 : vector<2x96xf32>
    %155 = math.exp %154 : vector<2x96xf32>
    %cst_39 = arith.constant 1.000000e+00 : f32
    %156 = vector.broadcast %cst_39 : f32 to vector<2x96xf32>
    %157 = arith.addf %156, %155 : vector<2x96xf32>
    %158 = arith.divf %156, %157 : vector<2x96xf32>
    %159 = vector.extract_strided_slice %152 {offsets = [0, 96], sizes = [2, 32], strides = [1, 1]} : vector<2x128xf32> to vector<2x32xf32>
    %160 = math.tanh %159 : vector<2x32xf32>
    %161 = vector.extract_strided_slice %158 {offsets = [0, 0], sizes = [2, 32], strides = [1, 1]} : vector<2x96xf32> to vector<2x32xf32>
    %162 = vector.extract_strided_slice %158 {offsets = [0, 32], sizes = [2, 32], strides = [1, 1]} : vector<2x96xf32> to vector<2x32xf32>
    %163 = vector.extract_strided_slice %158 {offsets = [0, 64], sizes = [2, 32], strides = [1, 1]} : vector<2x96xf32> to vector<2x32xf32>
    %164 = arith.mulf %162, %142 : vector<2x32xf32>
    %165 = arith.mulf %161, %160 : vector<2x32xf32>
    %166 = arith.addf %164, %165 : vector<2x32xf32>
    %167 = math.tanh %166 : vector<2x32xf32>
    %168 = arith.mulf %163, %167 : vector<2x32xf32>
    %c7 = arith.constant 7 : index
    %c0_40 = arith.constant 0 : index
    %c0_41 = arith.constant 0 : index
    %169 = vector.load %arg1[%c7, %c0_40, %c0_41] : memref<8x2x16xbf16, #tpu.memory_space<vmem>>, vector<1x2x16xbf16>
    %170 = vector.shape_cast %169 : vector<1x2x16xbf16> to vector<2x16xbf16>
    %cst_42 = arith.constant dense<0.000000e+00> : vector<2x128xf32>
    %171 = tpu.matmul %170, %0, %cst_42 {dimension_numbers = #tpu.dot_dimension_numbers<[1], [0], [0], [1], [0, 0, 1, 1], [], []>} : vector<2x16xbf16>, vector<16x128xbf16>, vector<2x128xf32> -> vector<2x128xf32>
    %172 = arith.truncf %168 : vector<2x32xf32> to vector<2x32xbf16>
    %cst_43 = arith.constant dense<0.000000e+00> : vector<2x128xf32>
    %173 = tpu.matmul %172, %1, %cst_43 {dimension_numbers = #tpu.dot_dimension_numbers<[1], [0], [0], [1], [0, 0, 1, 1], [], []>} : vector<2x32xbf16>, vector<32x128xbf16>, vector<2x128xf32> -> vector<2x128xf32>
    %174 = arith.addf %171, %173 : vector<2x128xf32>
    %175 = vector.broadcast %2 : vector<1x128xf32> to vector<2x128xf32>
    %176 = arith.addf %174, %175 : vector<2x128xf32>
    %177 = vector.extract_strided_slice %176 {offsets = [0, 0], sizes = [2, 96], strides = [1, 1]} : vector<2x128xf32> to vector<2x96xf32>
    %178 = arith.negf %177 : vector<2x96xf32>
    %179 = math.exp %178 : vector<2x96xf32>
    %cst_44 = arith.constant 1.000000e+00 : f32
    %180 = vector.broadcast %cst_44 : f32 to vector<2x96xf32>
    %181 = arith.addf %180, %179 : vector<2x96xf32>
    %182 = arith.divf %180, %181 : vector<2x96xf32>
    %183 = vector.extract_strided_slice %176 {offsets = [0, 96], sizes = [2, 32], strides = [1, 1]} : vector<2x128xf32> to vector<2x32xf32>
    %184 = math.tanh %183 : vector<2x32xf32>
    %185 = vector.extract_strided_slice %182 {offsets = [0, 0], sizes = [2, 32], strides = [1, 1]} : vector<2x96xf32> to vector<2x32xf32>
    %186 = vector.extract_strided_slice %182 {offsets = [0, 32], sizes = [2, 32], strides = [1, 1]} : vector<2x96xf32> to vector<2x32xf32>
    %187 = vector.extract_strided_slice %182 {offsets = [0, 64], sizes = [2, 32], strides = [1, 1]} : vector<2x96xf32> to vector<2x32xf32>
    %188 = arith.mulf %186, %166 : vector<2x32xf32>
    %189 = arith.mulf %185, %184 : vector<2x32xf32>
    %190 = arith.addf %188, %189 : vector<2x32xf32>
    %191 = math.tanh %190 : vector<2x32xf32>
    %192 = arith.mulf %187, %191 : vector<2x32xf32>
    %c7_45 = arith.constant 7 : index
    %c0_46 = arith.constant 0 : index
    %c0_47 = arith.constant 0 : index
    %193 = vector.load %arg1[%c7_45, %c0_46, %c0_47] : memref<8x2x16xbf16, #tpu.memory_space<vmem>>, vector<1x2x16xbf16>
    %194 = vector.shape_cast %193 : vector<1x2x16xbf16> to vector<2x16xbf16>
    %c0_48 = arith.constant 0 : index
    %c0_49 = arith.constant 0 : index
    %195 = vector.load %arg5[%c0_48, %c0_49] : memref<16x128xbf16, #tpu.memory_space<vmem>>, vector<16x128xbf16>
    %cst_50 = arith.constant dense<0.000000e+00> : vector<2x128xf32>
    %196 = tpu.matmul %194, %195, %cst_50 {dimension_numbers = #tpu.dot_dimension_numbers<[1], [0], [0], [1], [0, 0, 1, 1], [], []>} : vector<2x16xbf16>, vector<16x128xbf16>, vector<2x128xf32> -> vector<2x128xf32>
    %c0_51 = arith.constant 0 : index
    %c0_52 = arith.constant 0 : index
    %197 = vector.load %arg6[%c0_51, %c0_52] : memref<1x128xf32, #tpu.memory_space<vmem>>, vector<1x128xf32>
    %198 = vector.broadcast %197 : vector<1x128xf32> to vector<2x128xf32>
    %199 = arith.addf %196, %198 : vector<2x128xf32>
    %cst_53 = arith.constant 0.000000e+00 : f32
    %200 = vector.broadcast %cst_53 : f32 to vector<2x32xf32>
    %201 = vector.extract_strided_slice %199 {offsets = [0, 0], sizes = [2, 96], strides = [1, 1]} : vector<2x128xf32> to vector<2x96xf32>
    %202 = arith.negf %201 : vector<2x96xf32>
    %203 = math.exp %202 : vector<2x96xf32>
    %cst_54 = arith.constant 1.000000e+00 : f32
    %204 = vector.broadcast %cst_54 : f32 to vector<2x96xf32>
    %205 = arith.addf %204, %203 : vector<2x96xf32>
    %206 = arith.divf %204, %205 : vector<2x96xf32>
    %207 = vector.extract_strided_slice %199 {offsets = [0, 96], sizes = [2, 32], strides = [1, 1]} : vector<2x128xf32> to vector<2x32xf32>
    %208 = math.tanh %207 : vector<2x32xf32>
    %209 = vector.extract_strided_slice %206 {offsets = [0, 0], sizes = [2, 32], strides = [1, 1]} : vector<2x96xf32> to vector<2x32xf32>
    %210 = vector.extract_strided_slice %206 {offsets = [0, 32], sizes = [2, 32], strides = [1, 1]} : vector<2x96xf32> to vector<2x32xf32>
    %211 = vector.extract_strided_slice %206 {offsets = [0, 64], sizes = [2, 32], strides = [1, 1]} : vector<2x96xf32> to vector<2x32xf32>
    %212 = arith.mulf %210, %200 : vector<2x32xf32>
    %213 = arith.mulf %209, %208 : vector<2x32xf32>
    %214 = arith.addf %212, %213 : vector<2x32xf32>
    %215 = math.tanh %214 : vector<2x32xf32>
    %216 = arith.mulf %211, %215 : vector<2x32xf32>
    %217 = arith.truncf %192 : vector<2x32xf32> to vector<2x32xbf16>
    %c0_55 = arith.constant 0 : index
    %c0_56 = arith.constant 0 : index
    %218 = vector.load %arg7[%c0_55, %c0_56] : memref<32x128xbf16, #tpu.memory_space<vmem>>, vector<32x128xbf16>
    %cst_57 = arith.constant dense<0.000000e+00> : vector<2x128xf32>
    %219 = tpu.matmul %217, %218, %cst_57 {dimension_numbers = #tpu.dot_dimension_numbers<[1], [0], [0], [1], [0, 0, 1, 1], [], []>} : vector<2x32xbf16>, vector<32x128xbf16>, vector<2x128xf32> -> vector<2x128xf32>
    %220 = arith.truncf %216 : vector<2x32xf32> to vector<2x32xbf16>
    %c0_58 = arith.constant 0 : index
    %c0_59 = arith.constant 0 : index
    %221 = vector.load %arg8[%c0_58, %c0_59] : memref<32x128xbf16, #tpu.memory_space<vmem>>, vector<32x128xbf16>
    %cst_60 = arith.constant dense<0.000000e+00> : vector<2x128xf32>
    %222 = tpu.matmul %220, %221, %cst_60 {dimension_numbers = #tpu.dot_dimension_numbers<[1], [0], [0], [1], [0, 0, 1, 1], [], []>} : vector<2x32xbf16>, vector<32x128xbf16>, vector<2x128xf32> -> vector<2x128xf32>
    %223 = arith.addf %219, %222 : vector<2x128xf32>
    %c0_61 = arith.constant 0 : index
    %c0_62 = arith.constant 0 : index
    %224 = vector.load %arg9[%c0_61, %c0_62] : memref<1x128xf32, #tpu.memory_space<vmem>>, vector<1x128xf32>
    %225 = vector.broadcast %224 : vector<1x128xf32> to vector<2x128xf32>
    %226 = arith.addf %223, %225 : vector<2x128xf32>
    %c0_63 = arith.constant 0 : index
    %c0_64 = arith.constant 0 : index
    %227 = vector.load %arg10[%c0_63, %c0_64] : memref<2x128xf32, #tpu.memory_space<vmem>>, vector<2x128xf32>
    tpu.vector_store %arg10[%c0_63, %c0_64], %226 {strides = array<i32>} : memref<2x128xf32, #tpu.memory_space<vmem>>, vector<2x128xf32>,
    return
  }
  func.func @transform_0(%arg0: i32) -> (i32, i32, i32) {
    %c0_i32 = arith.constant 0 : i32
    %c0_i32_0 = arith.constant 0 : i32
    %c0_i32_1 = arith.constant 0 : i32
    return %c0_i32, %arg0, %c0_i32_0 : i32, i32, i32
  }
  func.func @transform_1(%arg0: i32) -> (i32, i32) {
    %c0_i32 = arith.constant 0 : i32
    %c0_i32_0 = arith.constant 0 : i32
    %c0_i32_1 = arith.constant 0 : i32
    return %c0_i32, %c0_i32_0 : i32, i32
  }
  func.func @transform_2(%arg0: i32) -> (i32, i32) {
    %c0_i32 = arith.constant 0 : i32
    %c0_i32_0 = arith.constant 0 : i32
    %c0_i32_1 = arith.constant 0 : i32
    return %c0_i32, %c0_i32_0 : i32, i32
  }
  func.func @transform_3(%arg0: i32) -> (i32, i32) {
    %c0_i32 = arith.constant 0 : i32
    %c0_i32_0 = arith.constant 0 : i32
    %c0_i32_1 = arith.constant 0 : i32
    return %c0_i32, %c0_i32_0 : i32, i32
  }
  func.func @transform_4(%arg0: i32) -> (i32, i32) {
    %c0_i32 = arith.constant 0 : i32
    %c0_i32_0 = arith.constant 0 : i32
    %c0_i32_1 = arith.constant 0 : i32
    return %c0_i32, %c0_i32_0 : i32, i32
  }
  func.func @transform_5(%arg0: i32) -> (i32, i32) {
    %c0_i32 = arith.constant 0 : i32
    %c0_i32_0 = arith.constant 0 : i32
    %c0_i32_1 = arith.constant 0 : i32
    return %c0_i32, %c0_i32_0 : i32, i32
  }
  func.func @transform_6(%arg0: i32) -> (i32, i32) {
    %c0_i32 = arith.constant 0 : i32
    %c0_i32_0 = arith.constant 0 : i32
    %c0_i32_1 = arith.constant 0 : i32
    return %c0_i32, %c0_i32_0 : i32, i32
  }
  func.func @transform_7(%arg0: i32) -> (i32, i32) {
    %c0_i32 = arith.constant 0 : i32
    %c0_i32_0 = arith.constant 0 : i32
    %c0_i32_1 = arith.constant 0 : i32
    return %c0_i32, %c0_i32_0 : i32, i32
  }
  func.func @transform_8(%arg0: i32) -> (i32, i32) {
    %c0_i32 = arith.constant 0 : i32
    %c0_i32_0 = arith.constant 0 : i32
    %c0_i32_1 = arith.constant 0 : i32
    return %c0_i32, %c0_i32_0 : i32, i32
  }
  func.func @transform_9(%arg0: i32) -> (i32, i32) {
    %c0_i32 = arith.constant 0 : i32
    %c0_i32_0 = arith.constant 0 : i32
    return %arg0, %c0_i32 : i32, i32
  }
}

</mosaic_0001>

<llo_original>
// kernel: tpu_custom_call.1
$region0: #{tpu_custom_call.1}
  #allocation0 [shape = 'u32[]', space=smem, size = 0x4, offset = 0x4, fixed_abs, tag = 'smem constant byte address 0x4 - core index']
  #allocation1 [shape = 'u32[144,128]{1,0:T(1,128)}', space=vmem, size = 0x12000, scoped, tag = 'internal scratch']
  %s0 = inlined_call_operand.hbm [shape: bf16[8,2,16], index: 0, kind: input, shape index: {}]
  %s1 = inlined_call_operand.hbm [shape: bf16[16,128], index: 1, kind: input, shape index: {}]
  %s2 = inlined_call_operand.hbm [shape: bf16[32,128], index: 2, kind: input, shape index: {}]
  %s3 = inlined_call_operand.vmem [shape: f32[1,128], index: 3, kind: input, shape index: {}]
  %s4 = inlined_call_operand.hbm [shape: bf16[16,128], index: 4, kind: input, shape index: {}]
  %s5 = inlined_call_operand.vmem [shape: f32[1,128], index: 5, kind: input, shape index: {}]
  %s6 = inlined_call_operand.vmem [shape: bf16[32,128], index: 6, kind: input, shape index: {}]
  %s7 = inlined_call_operand.hbm [shape: bf16[32,128], index: 7, kind: input, shape index: {}]
  %s8 = inlined_call_operand.vmem [shape: f32[1,128], index: 8, kind: input, shape index: {}]
  %s9 = inlined_call_operand.hbm [shape: f32[2,128], index: 9, kind: output, shape index: {}]
  %s10 = sld [smem:[#allocation0]]
  $region66: #{tpu_custom_call.1} parent=0
    _
  %s12 = ssub.s32 1, %s10
  %s13 = scalar_select 0, %s12, %s10
  $region1: #{tpu_custom_call.1} parent=0
    #allocation2 [shape = 'u8[4096]{0}', space=vmem, size = 0x1000, scoped, tag = 'input window, operand 0, single buffered']
    #allocation3 [shape = 's32[1]{0}', space=sflag, size = 0x4, scoped, tag = 'scoped memory for tpu_custom_call.1']
    #allocation4 [shape = 's32[1]{0}', space=sflag, size = 0x4, scoped, tag = 'scoped memory for tpu_custom_call.1']
    #allocation5 [shape = 'u8[4096]{0}', space=vmem, size = 0x1000, scoped, tag = 'input window, operand 1, single buffered']
    #allocation6 [shape = 's32[1]{0}', space=sflag, size = 0x4, scoped, tag = 'scoped memory for tpu_custom_call.1']
    #allocation7 [shape = 'u8[8192]{0}', space=vmem, size = 0x2000, scoped, tag = 'input window, operand 2, single buffered']
    #allocation8 [shape = 'u8[4096]{0}', space=vmem, size = 0x1000, scoped, tag = 'input window, operand 4, single buffered']
    #allocation9 [shape = 's32[1]{0}', space=sflag, size = 0x4, scoped, tag = 'scoped memory for tpu_custom_call.1']
    #allocation10 [shape = 'u8[8192]{0}', space=vmem, size = 0x2000, scoped, tag = 'input window, operand 7, single buffered']
    #allocation11 [shape = 'u8[1024]{0}', space=vmem, size = 0x400, scoped, tag = 'output window, operand 0, single buffered']
    %14 = vsyncpa [#allocation3], 0
    %15 = vsyncpa [#allocation6], 0
    %16 = vsyncpa [#allocation9], 0
    %17 = vsyncpa [#allocation4], 0
    // Predicated region
    $region2: #{tpu_custom_call.1} parent=1 // pred_check
      _
    $region3: #{tpu_custom_call.1} parent=1 // pred_check_branch
      %19 = sbr.rel (0) target = $region5
    $region4: #{tpu_custom_call.1} parent=1 // pred_region
      %s21 = ssub.s32 128, 128
      %22 = vsyncadd [#allocation3], %s21
      %s23 = sshll.u32 [#allocation2], 4
      %s24 = int_to_ptr.vmem [resolvable:$true] %s23
      %29 = dma.hbm_to_vmem [thread:$0]  %s0, 128, %s24, [#allocation3], 16, 16, 1
    $region5: #{tpu_custom_call.1} parent=1 // pred_fallthru
      _
    // Predicated region
    $region6: #{tpu_custom_call.1} parent=1 // pred_check
      _
    $region7: #{tpu_custom_call.1} parent=1 // pred_check_branch
      %31 = sbr.rel (0) target = $region9
    $region8: #{tpu_custom_call.1} parent=1 // pred_region
      %s33 = ssub.s32 128, 128
      %34 = vsyncadd [#allocation6], %s33
      %s35 = sshll.u32 [#allocation5], 4
      %s36 = int_to_ptr.vmem [resolvable:$true] %s35
      %41 = dma.hbm_to_vmem [thread:$0]  %s1, 128, %s36, [#allocation6], 64, 64, 4
    $region9: #{tpu_custom_call.1} parent=1 // pred_fallthru
      _
    // Predicated region
    $region10: #{tpu_custom_call.1} parent=1 // pred_check
      _
    $region11: #{tpu_custom_call.1} parent=1 // pred_check_branch
      %43 = sbr.rel (0) target = $region13
    $region12: #{tpu_custom_call.1} parent=1 // pred_region
      %s45 = ssub.s32 256, 256
      %46 = vsyncadd [#allocation6], %s45
      %s47 = sshll.u32 [#allocation7], 4
      %s48 = int_to_ptr.vmem [resolvable:$true] %s47
      %53 = dma.hbm_to_vmem [thread:$0]  %s2, 256, %s48, [#allocation6], 64, 64, 4
    $region13: #{tpu_custom_call.1} parent=1 // pred_fallthru
      _
    // Predicated region
    $region14: #{tpu_custom_call.1} parent=1 // pred_check
      _
    $region15: #{tpu_custom_call.1} parent=1 // pred_check_branch
      %55 = sbr.rel (0) target = $region17
    $region16: #{tpu_custom_call.1} parent=1 // pred_region
      _
    $region17: #{tpu_custom_call.1} parent=1 // pred_fallthru
      _
    // Predicated region
    $region18: #{tpu_custom_call.1} parent=1 // pred_check
      _
    $region19: #{tpu_custom_call.1} parent=1 // pred_check_branch
      %57 = sbr.rel (0) target = $region21
    $region20: #{tpu_custom_call.1} parent=1 // pred_region
      %s59 = ssub.s32 128, 128
      %60 = vsyncadd [#allocation9], %s59
      %s61 = sshll.u32 [#allocation8], 4
      %s62 = int_to_ptr.vmem [resolvable:$true] %s61
      %67 = dma.hbm_to_vmem [thread:$0]  %s4, 128, %s62, [#allocation9], 64, 64, 4
    $region21: #{tpu_custom_call.1} parent=1 // pred_fallthru
      _
    // Predicated region
    $region22: #{tpu_custom_call.1} parent=1 // pred_check
      _
    $region23: #{tpu_custom_call.1} parent=1 // pred_check_branch
      %69 = sbr.rel (0) target = $region25
    $region24: #{tpu_custom_call.1} parent=1 // pred_region
      _
    $region25: #{tpu_custom_call.1} parent=1 // pred_fallthru
      _
    // Predicated region
    $region26: #{tpu_custom_call.1} parent=1 // pred_check
      _
    $region27: #{tpu_custom_call.1} parent=1 // pred_check_branch
      %71 = sbr.rel (0) target = $region29
    $region28: #{tpu_custom_call.1} parent=1 // pred_region
      _
    $region29: #{tpu_custom_call.1} parent=1 // pred_fallthru
      _
    // Predicated region
    $region30: #{tpu_custom_call.1} parent=1 // pred_check
      _
    $region31: #{tpu_custom_call.1} parent=1 // pred_check_branch
      %73 = sbr.rel (0) target = $region33
    $region32: #{tpu_custom_call.1} parent=1 // pred_region
      %s75 = ssub.s32 256, 256
      %76 = vsyncadd [#allocation9], %s75
      %s77 = sshll.u32 [#allocation10], 4
      %s78 = int_to_ptr.vmem [resolvable:$true] %s77
      %83 = dma.hbm_to_vmem [thread:$0]  %s7, 256, %s78, [#allocation9], 64, 64, 4
    $region33: #{tpu_custom_call.1} parent=1 // pred_fallthru
      _
    // Predicated region
    $region34: #{tpu_custom_call.1} parent=1 // pred_check
      _
    $region35: #{tpu_custom_call.1} parent=1 // pred_check_branch
      %85 = sbr.rel (0) target = $region37
    $region36: #{tpu_custom_call.1} parent=1 // pred_region
      _
    $region37: #{tpu_custom_call.1} parent=1 // pred_fallthru
      _
    // Predicated region
    $region38: #{tpu_custom_call.1} parent=1 // pred_check
      _
    $region39: #{tpu_custom_call.1} parent=1 // pred_check_branch
      %87 = sbr.rel (0) target = $region41
    $region40: #{tpu_custom_call.1} parent=1 // pred_region
      %88 = dma.done [#allocation3], 128
    $region41: #{tpu_custom_call.1} parent=1 // pred_fallthru
      _
    // Predicated region
    $region42: #{tpu_custom_call.1} parent=1 // pred_check
      _
    $region43: #{tpu_custom_call.1} parent=1 // pred_check_branch
      %90 = sbr.rel (0) target = $region45
    $region44: #{tpu_custom_call.1} parent=1 // pred_region
      %91 = dma.done [#allocation6], 128
    $region45: #{tpu_custom_call.1} parent=1 // pred_fallthru
      _
    // Predicated region
    $region46: #{tpu_custom_call.1} parent=1 // pred_check
      _
    $region47: #{tpu_custom_call.1} parent=1 // pred_check_branch
      %93 = sbr.rel (0) target = $region49
    $region48: #{tpu_custom_call.1} parent=1 // pred_region
      %94 = dma.done [#allocation6], 256
    $region49: #{tpu_custom_call.1} parent=1 // pred_fallthru
      _
    // Predicated region
    $region50: #{tpu_custom_call.1} parent=1 // pred_check
      _
    $region51: #{tpu_custom_call.1} parent=1 // pred_check_branch
      %96 = sbr.rel (0) target = $region53
    $region52: #{tpu_custom_call.1} parent=1 // pred_region
      %97 = dma.done [#allocation9], 128
    $region53: #{tpu_custom_call.1} parent=1 // pred_fallthru
      _
    // Predicated region
    $region54: #{tpu_custom_call.1} parent=1 // pred_check
      _
    $region55: #{tpu_custom_call.1} parent=1 // pred_check_branch
      %99 = sbr.rel (0) target = $region57
    $region56: #{tpu_custom_call.1} parent=1 // pred_region
      %100 = dma.done [#allocation9], 256
    $region57: #{tpu_custom_call.1} parent=1 // pred_fallthru
      _
    %v102 = vld [vmem:[#allocation5] sm:$0xf]
    %v103 = vld [vmem:[#allocation5 + $0x4] sm:$0xf]
    %v104 = vld [vmem:[#allocation7] sm:$0xf]
    %v105 = vld [vmem:[#allocation7 + $0x4] sm:$0xf]
    %v106 = vld [vmem:[#allocation7 + $0x8] sm:$0xf]
    %v107 = vld [vmem:[#allocation7 + $0xc] sm:$0xf]
    %v108 = vld [vmem:[%s3] sm:$0x1]
    %v109 = vld [vmem:[#allocation2] sm:$0x1]
    %v111 = vlaneseq
    %v112 = vshrl.u32 %v111, 7
    %v113 = vsub.s32 0, %v112
    %v114 = vrot.slane %v108, %v113
    %v118 = vunpack.c.l.b16 %v102
    %v119 = vunpack.c.l.b16 %v103
    %v120 = vpack.c.b16 %v119, %v118
    %vm122 = vcmask 130048
    %v124 = vsel %vm122, %v109, 0
    %126 = vmatprep.subr.bf16.mxu0 0
    %127 = vmatpush1.bf16.msra.mxu0 %v120
    %128 = vmatprep.subr.bf16.mxu0 0
    %129 = vmatpush1.bf16.msra.mxu0 0
    %130 = vmatprep.subr.bf16.mxu0 0
    %131 = vmatpush1.bf16.msra.mxu0 0
    %132 = vmatprep.subr.bf16.mxu0 0
    %133 = vmatpush1.bf16.msra.mxu0 0
    %134 = vmatprep.subr.bf16.mxu0 0
    %135 = vmatpush1.bf16.msra.mxu0 0
    %136 = vmatprep.subr.bf16.mxu0 0
    %137 = vmatpush1.bf16.msra.mxu0 0
    %138 = vmatprep.subr.bf16.mxu0 0
    %139 = vmatpush1.bf16.msra.mxu0 0
    %140 = vmatprep.subr.bf16.mxu0 0
    %141 = vmatpush1.bf16.msra.mxu0 0
    %142 = vmatprep.subr.bf16.mxu0 0
    %143 = vmatpush1.bf16.msra.mxu0 0
    %144 = vmatprep.subr.bf16.mxu0 0
    %145 = vmatpush1.bf16.msra.mxu0 0
    %146 = vmatprep.subr.bf16.mxu0 0
    %147 = vmatpush1.bf16.msra.mxu0 0
    %148 = vmatprep.subr.bf16.mxu0 0
    %149 = vmatpush1.bf16.msra.mxu0 0
    %150 = vmatprep.subr.bf16.mxu0 0
    %151 = vmatpush1.bf16.msra.mxu0 0
    %152 = vmatprep.subr.bf16.mxu0 0
    %153 = vmatpush1.bf16.msra.mxu0 0
    %154 = vmatprep.subr.bf16.mxu0 0
    %155 = vmatpush1.bf16.msra.mxu0 0
    %156 = vmatprep.subr.bf16.mxu0 0
    %157 = vmatpush1.bf16.msra.mxu0 0
    %158 = vmatprep.mubr.bf16.mxu0 0
    %159 = vmatmul.mubr.bf16.gmra.mrb[0].mxu0 %v124
    %v160 = vpop.f32.mrb[0].mxu0
    %v161 = vadd.f32 %v114, %v160
    %v162 = vpop.f32.mrb[0].mxu0
    %v163 = vpop.f32.mrb[0].mxu0
    %v164 = vpop.f32.mrb[0].mxu0
    %165 = vdwg.mxu0
    %v166 = vxor.u32 %v161, 2147483648
    %v167 = vmul.f32 %v166, 1.442695
    %v168 = vpow.pop %v167
    %v169 = vadd.f32 %v168, 1.0
    %v170 = vrcp.pop %v169
    %v171 = vmul.f32 1.0, %v170
    %v172 = vtanh.pop %v161
    %v173 = vmul.f32 %v171, 0.0
    %175 = vrot.lane.b32.xlu0 %v172, 32
    %v176 = vpop.permute.xlu0 %175
    %v178 = vmul.f32 %v171, %v176
    %180 = vrot.lane.b32.xlu0 %v178, 32
    %v181 = vpop.permute.xlu0 %180
    %v183 = vadd.f32 %v173, %v181
    %v184 = vtanh.pop %v183
    %186 = vrot.lane.b32.xlu0 %v184, 32
    %v187 = vpop.permute.xlu0 %186
    %v189 = vmul.f32 %v171, %v187
    %s190 = scalar_lea.vmem [#allocation2], 1
    %v191 = vld [vmem:[%s190] sm:$0x1]
    %v192 = vpack.c.bf16 %v189, %v189
    %194 = vrot.lane.b32.xlu0 %v192, 64
    %v195 = vpop.permute.xlu0 %194
    %v200 = vunpack.c.l.b16 %v104
    %v201 = vunpack.c.l.b16 %v105
    %v202 = vunpack.c.l.b16 %v106
    %v203 = vunpack.c.l.b16 %v107
    %v204 = vpack.c.b16 %v201, %v200
    %v205 = vpack.c.b16 %v203, %v202
    %vm208 = vcmask 261120
    %v210 = vsel %vm208, %v195, 0
    %212 = vmatprep.subr.bf16.mxu0 0
    %213 = vmatpush1.bf16.msra.mxu0 %v204
    %214 = vmatprep.subr.bf16.mxu0 0
    %215 = vmatpush1.bf16.msra.mxu0 %v205
    %216 = vmatprep.subr.bf16.mxu0 0
    %217 = vmatpush1.bf16.msra.mxu0 0
    %218 = vmatprep.subr.bf16.mxu0 0
    %219 = vmatpush1.bf16.msra.mxu0 0
    %220 = vmatprep.subr.bf16.mxu0 0
    %221 = vmatpush1.bf16.msra.mxu0 0
    %222 = vmatprep.subr.bf16.mxu0 0
    %223 = vmatpush1.bf16.msra.mxu0 0
    %224 = vmatprep.subr.bf16.mxu0 0
    %225 = vmatpush1.bf16.msra.mxu0 0
    %226 = vmatprep.subr.bf16.mxu0 0
    %227 = vmatpush1.bf16.msra.mxu0 0
    %228 = vmatprep.subr.bf16.mxu0 0
    %229 = vmatpush1.bf16.msra.mxu0 0
    %230 = vmatprep.subr.bf16.mxu0 0
    %231 = vmatpush1.bf16.msra.mxu0 0
    %232 = vmatprep.subr.bf16.mxu0 0
    %233 = vmatpush1.bf16.msra.mxu0 0
    %234 = vmatprep.subr.bf16.mxu0 0
    %235 = vmatpush1.bf16.msra.mxu0 0
    %236 = vmatprep.subr.bf16.mxu0 0
    %237 = vmatpush1.bf16.msra.mxu0 0
    %238 = vmatprep.subr.bf16.mxu0 0
    %239 = vmatpush1.bf16.msra.mxu0 0
    %240 = vmatprep.subr.bf16.mxu0 0
    %241 = vmatpush1.bf16.msra.mxu0 0
    %242 = vmatprep.subr.bf16.mxu0 0
    %243 = vmatpush1.bf16.msra.mxu0 0
    %244 = vmatprep.mubr.bf16.mxu0 0
    %245 = vmatmul.mubr.bf16.gmra.mrb[0].mxu0 %v210
    %v246 = vpop.f32.mrb[0].mxu0
    %v247 = vadd.f32 0.0, %v246
    %v248 = vpop.f32.mrb[0].mxu0
    %v249 = vpop.f32.mrb[0].mxu0
    %v250 = vpop.f32.mrb[0].mxu0
    %251 = vdwg.mxu0
    %v253 = vsel %vm122, %v191, 0
    %255 = vmatprep.subr.bf16.mxu0 0
    %256 = vmatpush1.bf16.msra.mxu0 %v120
    %257 = vmatprep.subr.bf16.mxu0 0
    %258 = vmatpush1.bf16.msra.mxu0 0
    %259 = vmatprep.subr.bf16.mxu0 0
    %260 = vmatpush1.bf16.msra.mxu0 0
    %261 = vmatprep.subr.bf16.mxu0 0
    %262 = vmatpush1.bf16.msra.mxu0 0
    %263 = vmatprep.subr.bf16.mxu0 0
    %264 = vmatpush1.bf16.msra.mxu0 0
    %265 = vmatprep.subr.bf16.mxu0 0
    %266 = vmatpush1.bf16.msra.mxu0 0
    %267 = vmatprep.subr.bf16.mxu0 0
    %268 = vmatpush1.bf16.msra.mxu0 0
    %269 = vmatprep.subr.bf16.mxu0 0
    %270 = vmatpush1.bf16.msra.mxu0 0
    %271 = vmatprep.subr.bf16.mxu0 0
    %272 = vmatpush1.bf16.msra.mxu0 0
    %273 = vmatprep.subr.bf16.mxu0 0
    %274 = vmatpush1.bf16.msra.mxu0 0
    %275 = vmatprep.subr.bf16.mxu0 0
    %276 = vmatpush1.bf16.msra.mxu0 0
    %277 = vmatprep.subr.bf16.mxu0 0
    %278 = vmatpush1.bf16.msra.mxu0 0
    %279 = vmatprep.subr.bf16.mxu0 0
    %280 = vmatpush1.bf16.msra.mxu0 0
    %281 = vmatprep.subr.bf16.mxu0 0
    %282 = vmatpush1.bf16.msra.mxu0 0
    %283 = vmatprep.subr.bf16.mxu0 0
    %284 = vmatpush1.bf16.msra.mxu0 0
    %285 = vmatprep.subr.bf16.mxu0 0
    %286 = vmatpush1.bf16.msra.mxu0 0
    %287 = vmatprep.mubr.bf16.mxu0 0
    %288 = vmatmul.mubr.bf16.gmra.mrb[0].mxu0 %v253
    %v289 = vpop.f32.mrb[0].mxu0
    %v290 = vadd.f32 %v247, %v289
    %v291 = vpop.f32.mrb[0].mxu0
    %v292 = vpop.f32.mrb[0].mxu0
    %v293 = vpop.f32.mrb[0].mxu0
    %294 = vdwg.mxu0
    %v295 = vadd.f32 %v290, %v114
    %v296 = vxor.u32 %v295, 2147483648
    %v297 = vmul.f32 %v296, 1.442695
    %v298 = vpow.pop %v297
    %v299 = vadd.f32 %v298, 1.0
    %v300 = vrcp.pop %v299
    %v301 = vmul.f32 1.0, %v300
    %v302 = vtanh.pop %v295
    %v303 = vmul.f32 %v301, %v183
    %305 = vrot.lane.b32.xlu0 %v302, 32
    %v306 = vpop.permute.xlu0 %305
    %v308 = vmul.f32 %v301, %v306
    %310 = vrot.lane.b32.xlu0 %v308, 32
    %v311 = vpop.permute.xlu0 %310
    %v313 = vadd.f32 %v303, %v311
    %v314 = vtanh.pop %v313
    %316 = vrot.lane.b32.xlu0 %v314, 32
    %v317 = vpop.permute.xlu0 %316
    %v319 = vmul.f32 %v301, %v317
    %s320 = scalar_lea.vmem [#allocation2], 2
    %v321 = vld [vmem:[%s320] sm:$0x1]
    %v322 = vpack.c.bf16 %v319, %v319
    %324 = vrot.lane.b32.xlu0 %v322, 64
    %v325 = vpop.permute.xlu0 %324
    %v327 = vsel %vm208, %v325, 0
    %329 = vmatprep.subr.bf16.mxu0 0
    %330 = vmatpush1.bf16.msra.mxu0 %v204
    %331 = vmatprep.subr.bf16.mxu0 0
    %332 = vmatpush1.bf16.msra.mxu0 %v205
    %333 = vmatprep.subr.bf16.mxu0 0
    %334 = vmatpush1.bf16.msra.mxu0 0
    %335 = vmatprep.subr.bf16.mxu0 0
    %336 = vmatpush1.bf16.msra.mxu0 0
    %337 = vmatprep.subr.bf16.mxu0 0
    %338 = vmatpush1.bf16.msra.mxu0 0
    %339 = vmatprep.subr.bf16.mxu0 0
    %340 = vmatpush1.bf16.msra.mxu0 0
    %341 = vmatprep.subr.bf16.mxu0 0
    %342 = vmatpush1.bf16.msra.mxu0 0
    %343 = vmatprep.subr.bf16.mxu0 0
    %344 = vmatpush1.bf16.msra.mxu0 0
    %345 = vmatprep.subr.bf16.mxu0 0
    %346 = vmatpush1.bf16.msra.mxu0 0
    %347 = vmatprep.subr.bf16.mxu0 0
    %348 = vmatpush1.bf16.msra.mxu0 0
    %349 = vmatprep.subr.bf16.mxu0 0
    %350 = vmatpush1.bf16.msra.mxu0 0
    %351 = vmatprep.subr.bf16.mxu0 0
    %352 = vmatpush1.bf16.msra.mxu0 0
    %353 = vmatprep.subr.bf16.mxu0 0
    %354 = vmatpush1.bf16.msra.mxu0 0
    %355 = vmatprep.subr.bf16.mxu0 0
    %356 = vmatpush1.bf16.msra.mxu0 0
    %357 = vmatprep.subr.bf16.mxu0 0
    %358 = vmatpush1.bf16.msra.mxu0 0
    %359 = vmatprep.subr.bf16.mxu0 0
    %360 = vmatpush1.bf16.msra.mxu0 0
    %361 = vmatprep.mubr.bf16.mxu0 0
    %362 = vmatmul.mubr.bf16.gmra.mrb[0].mxu0 %v327
    %v363 = vpop.f32.mrb[0].mxu0
    %v364 = vadd.f32 0.0, %v363
    %v365 = vpop.f32.mrb[0].mxu0
    %v366 = vpop.f32.mrb[0].mxu0
    %v367 = vpop.f32.mrb[0].mxu0
    %368 = vdwg.mxu0
    %v370 = vsel %vm122, %v321, 0
    %372 = vmatprep.subr.bf16.mxu0 0
    %373 = vmatpush1.bf16.msra.mxu0 %v120
    %374 = vmatprep.subr.bf16.mxu0 0
    %375 = vmatpush1.bf16.msra.mxu0 0
    %376 = vmatprep.subr.bf16.mxu0 0
    %377 = vmatpush1.bf16.msra.mxu0 0
    %378 = vmatprep.subr.bf16.mxu0 0
    %379 = vmatpush1.bf16.msra.mxu0 0
    %380 = vmatprep.subr.bf16.mxu0 0
    %381 = vmatpush1.bf16.msra.mxu0 0
    %382 = vmatprep.subr.bf16.mxu0 0
    %383 = vmatpush1.bf16.msra.mxu0 0
    %384 = vmatprep.subr.bf16.mxu0 0
    %385 = vmatpush1.bf16.msra.mxu0 0
    %386 = vmatprep.subr.bf16.mxu0 0
    %387 = vmatpush1.bf16.msra.mxu0 0
    %388 = vmatprep.subr.bf16.mxu0 0
    %389 = vmatpush1.bf16.msra.mxu0 0
    %390 = vmatprep.subr.bf16.mxu0 0
    %391 = vmatpush1.bf16.msra.mxu0 0
    %392 = vmatprep.subr.bf16.mxu0 0
    %393 = vmatpush1.bf16.msra.mxu0 0
    %394 = vmatprep.subr.bf16.mxu0 0
    %395 = vmatpush1.bf16.msra.mxu0 0
    %396 = vmatprep.subr.bf16.mxu0 0
    %397 = vmatpush1.bf16.msra.mxu0 0
    %398 = vmatprep.subr.bf16.mxu0 0
    %399 = vmatpush1.bf16.msra.mxu0 0
    %400 = vmatprep.subr.bf16.mxu0 0
    %401 = vmatpush1.bf16.msra.mxu0 0
    %402 = vmatprep.subr.bf16.mxu0 0
    %403 = vmatpush1.bf16.msra.mxu0 0
    %404 = vmatprep.mubr.bf16.mxu0 0
    %405 = vmatmul.mubr.bf16.gmra.mrb[0].mxu0 %v370
    %v406 = vpop.f32.mrb[0].mxu0
    %v407 = vadd.f32 %v364, %v406
    %v408 = vpop.f32.mrb[0].mxu0
    %v409 = vpop.f32.mrb[0].mxu0
    %v410 = vpop.f32.mrb[0].mxu0
    %411 = vdwg.mxu0
    %v412 = vadd.f32 %v407, %v114
    %v413 = vxor.u32 %v412, 2147483648
    %v414 = vmul.f32 %v413, 1.442695
    %v415 = vpow.pop %v414
    %v416 = vadd.f32 %v415, 1.0
    %v417 = vrcp.pop %v416
    %v418 = vmul.f32 1.0, %v417
    %v419 = vtanh.pop %v412
    %v420 = vmul.f32 %v418, %v313
    %422 = vrot.lane.b32.xlu0 %v419, 32
    %v423 = vpop.permute.xlu0 %422
    %v425 = vmul.f32 %v418, %v423
    %427 = vrot.lane.b32.xlu0 %v425, 32
    %v428 = vpop.permute.xlu0 %427
    %v430 = vadd.f32 %v420, %v428
    %v431 = vtanh.pop %v430
    %433 = vrot.lane.b32.xlu0 %v431, 32
    %v434 = vpop.permute.xlu0 %433
    %v436 = vmul.f32 %v418, %v434
    %s437 = scalar_lea.vmem [#allocation2], 3
    %v438 = vld [vmem:[%s437] sm:$0x1]
    %v439 = vpack.c.bf16 %v436, %v436
    %441 = vrot.lane.b32.xlu0 %v439, 64
    %v442 = vpop.permute.xlu0 %441
    %v444 = vsel %vm208, %v442, 0
    %446 = vmatprep.subr.bf16.mxu0 0
    %447 = vmatpush1.bf16.msra.mxu0 %v204
    %448 = vmatprep.subr.bf16.mxu0 0
    %449 = vmatpush1.bf16.msra.mxu0 %v205
    %450 = vmatprep.subr.bf16.mxu0 0
    %451 = vmatpush1.bf16.msra.mxu0 0
    %452 = vmatprep.subr.bf16.mxu0 0
    %453 = vmatpush1.bf16.msra.mxu0 0
    %454 = vmatprep.subr.bf16.mxu0 0
    %455 = vmatpush1.bf16.msra.mxu0 0
    %456 = vmatprep.subr.bf16.mxu0 0
    %457 = vmatpush1.bf16.msra.mxu0 0
    %458 = vmatprep.subr.bf16.mxu0 0
    %459 = vmatpush1.bf16.msra.mxu0 0
    %460 = vmatprep.subr.bf16.mxu0 0
    %461 = vmatpush1.bf16.msra.mxu0 0
    %462 = vmatprep.subr.bf16.mxu0 0
    %463 = vmatpush1.bf16.msra.mxu0 0
    %464 = vmatprep.subr.bf16.mxu0 0
    %465 = vmatpush1.bf16.msra.mxu0 0
    %466 = vmatprep.subr.bf16.mxu0 0
    %467 = vmatpush1.bf16.msra.mxu0 0
    %468 = vmatprep.subr.bf16.mxu0 0
    %469 = vmatpush1.bf16.msra.mxu0 0
    %470 = vmatprep.subr.bf16.mxu0 0
    %471 = vmatpush1.bf16.msra.mxu0 0
    %472 = vmatprep.subr.bf16.mxu0 0
    %473 = vmatpush1.bf16.msra.mxu0 0
    %474 = vmatprep.subr.bf16.mxu0 0
    %475 = vmatpush1.bf16.msra.mxu0 0
    %476 = vmatprep.subr.bf16.mxu0 0
    %477 = vmatpush1.bf16.msra.mxu0 0
    %478 = vmatprep.mubr.bf16.mxu0 0
    %479 = vmatmul.mubr.bf16.gmra.mrb[0].mxu0 %v444
    %v480 = vpop.f32.mrb[0].mxu0
    %v481 = vadd.f32 0.0, %v480
    %v482 = vpop.f32.mrb[0].mxu0
    %v483 = vpop.f32.mrb[0].mxu0
    %v484 = vpop.f32.mrb[0].mxu0
    %485 = vdwg.mxu0
    %v487 = vsel %vm122, %v438, 0
    %489 = vmatprep.subr.bf16.mxu0 0
    %490 = vmatpush1.bf16.msra.mxu0 %v120
    %491 = vmatprep.subr.bf16.mxu0 0
    %492 = vmatpush1.bf16.msra.mxu0 0
    %493 = vmatprep.subr.bf16.mxu0 0
    %494 = vmatpush1.bf16.msra.mxu0 0
    %495 = vmatprep.subr.bf16.mxu0 0
    %496 = vmatpush1.bf16.msra.mxu0 0
    %497 = vmatprep.subr.bf16.mxu0 0
    %498 = vmatpush1.bf16.msra.mxu0 0
    %499 = vmatprep.subr.bf16.mxu0 0
    %500 = vmatpush1.bf16.msra.mxu0 0
    %501 = vmatprep.subr.bf16.mxu0 0
    %502 = vmatpush1.bf16.msra.mxu0 0
    %503 = vmatprep.subr.bf16.mxu0 0
    %504 = vmatpush1.bf16.msra.mxu0 0
    %505 = vmatprep.subr.bf16.mxu0 0
    %506 = vmatpush1.bf16.msra.mxu0 0
    %507 = vmatprep.subr.bf16.mxu0 0
    %508 = vmatpush1.bf16.msra.mxu0 0
    %509 = vmatprep.subr.bf16.mxu0 0
    %510 = vmatpush1.bf16.msra.mxu0 0
    %511 = vmatprep.subr.bf16.mxu0 0
    %512 = vmatpush1.bf16.msra.mxu0 0
    %513 = vmatprep.subr.bf16.mxu0 0
    %514 = vmatpush1.bf16.msra.mxu0 0
    %515 = vmatprep.subr.bf16.mxu0 0
    %516 = vmatpush1.bf16.msra.mxu0 0
    %517 = vmatprep.subr.bf16.mxu0 0
    %518 = vmatpush1.bf16.msra.mxu0 0
    %519 = vmatprep.subr.bf16.mxu0 0
    %520 = vmatpush1.bf16.msra.mxu0 0
    %521 = vmatprep.mubr.bf16.mxu0 0
    %522 = vmatmul.mubr.bf16.gmra.mrb[0].mxu0 %v487
    %v523 = vpop.f32.mrb[0].mxu0
    %v524 = vadd.f32 %v481, %v523
    %v525 = vpop.f32.mrb[0].mxu0
    %v526 = vpop.f32.mrb[0].mxu0
    %v527 = vpop.f32.mrb[0].mxu0
    %528 = vdwg.mxu0
    %v529 = vadd.f32 %v524, %v114
    %v530 = vxor.u32 %v529, 2147483648
    %v531 = vmul.f32 %v530, 1.442695
    %v532 = vpow.pop %v531
    %v533 = vadd.f32 %v532, 1.0
    %v534 = vrcp.pop %v533
    %v535 = vmul.f32 1.0, %v534
    %v536 = vtanh.pop %v529
    %v537 = vmul.f32 %v535, %v430
    %539 = vrot.lane.b32.xlu0 %v536, 32
    %v540 = vpop.permute.xlu0 %539
    %v542 = vmul.f32 %v535, %v540
    %544 = vrot.lane.b32.xlu0 %v542, 32
    %v545 = vpop.permute.xlu0 %544
    %v547 = vadd.f32 %v537, %v545
    %v548 = vtanh.pop %v547
    %550 = vrot.lane.b32.xlu0 %v548, 32
    %v551 = vpop.permute.xlu0 %550
    %v553 = vmul.f32 %v535, %v551
    %s554 = scalar_lea.vmem [#allocation2], 4
    %v555 = vld [vmem:[%s554] sm:$0x1]
    %v556 = vpack.c.bf16 %v553, %v553
    %558 = vrot.lane.b32.xlu0 %v556, 64
    %v559 = vpop.permute.xlu0 %558
    %v561 = vsel %vm208, %v559, 0
    %563 = vmatprep.subr.bf16.mxu0 0
    %564 = vmatpush1.bf16.msra.mxu0 %v204
    %565 = vmatprep.subr.bf16.mxu0 0
    %566 = vmatpush1.bf16.msra.mxu0 %v205
    %567 = vmatprep.subr.bf16.mxu0 0
    %568 = vmatpush1.bf16.msra.mxu0 0
    %569 = vmatprep.subr.bf16.mxu0 0
    %570 = vmatpush1.bf16.msra.mxu0 0
    %571 = vmatprep.subr.bf16.mxu0 0
    %572 = vmatpush1.bf16.msra.mxu0 0
    %573 = vmatprep.subr.bf16.mxu0 0
    %574 = vmatpush1.bf16.msra.mxu0 0
    %575 = vmatprep.subr.bf16.mxu0 0
    %576 = vmatpush1.bf16.msra.mxu0 0
    %577 = vmatprep.subr.bf16.mxu0 0
    %578 = vmatpush1.bf16.msra.mxu0 0
    %579 = vmatprep.subr.bf16.mxu0 0
    %580 = vmatpush1.bf16.msra.mxu0 0
    %581 = vmatprep.subr.bf16.mxu0 0
    %582 = vmatpush1.bf16.msra.mxu0 0
    %583 = vmatprep.subr.bf16.mxu0 0
    %584 = vmatpush1.bf16.msra.mxu0 0
    %585 = vmatprep.subr.bf16.mxu0 0
    %586 = vmatpush1.bf16.msra.mxu0 0
    %587 = vmatprep.subr.bf16.mxu0 0
    %588 = vmatpush1.bf16.msra.mxu0 0
    %589 = vmatprep.subr.bf16.mxu0 0
    %590 = vmatpush1.bf16.msra.mxu0 0
    %591 = vmatprep.subr.bf16.mxu0 0
    %592 = vmatpush1.bf16.msra.mxu0 0
    %593 = vmatprep.subr.bf16.mxu0 0
    %594 = vmatpush1.bf16.msra.mxu0 0
    %595 = vmatprep.mubr.bf16.mxu0 0
    %596 = vmatmul.mubr.bf16.gmra.mrb[0].mxu0 %v561
    %v597 = vpop.f32.mrb[0].mxu0
    %v598 = vadd.f32 0.0, %v597
    %v599 = vpop.f32.mrb[0].mxu0
    %v600 = vpop.f32.mrb[0].mxu0
    %v601 = vpop.f32.mrb[0].mxu0
    %602 = vdwg.mxu0
    %v604 = vsel %vm122, %v555, 0
    %606 = vmatprep.subr.bf16.mxu0 0
    %607 = vmatpush1.bf16.msra.mxu0 %v120
    %608 = vmatprep.subr.bf16.mxu0 0
    %609 = vmatpush1.bf16.msra.mxu0 0
    %610 = vmatprep.subr.bf16.mxu0 0
    %611 = vmatpush1.bf16.msra.mxu0 0
    %612 = vmatprep.subr.bf16.mxu0 0
    %613 = vmatpush1.bf16.msra.mxu0 0
    %614 = vmatprep.subr.bf16.mxu0 0
    %615 = vmatpush1.bf16.msra.mxu0 0
    %616 = vmatprep.subr.bf16.mxu0 0
    %617 = vmatpush1.bf16.msra.mxu0 0
    %618 = vmatprep.subr.bf16.mxu0 0
    %619 = vmatpush1.bf16.msra.mxu0 0
    %620 = vmatprep.subr.bf16.mxu0 0
    %621 = vmatpush1.bf16.msra.mxu0 0
    %622 = vmatprep.subr.bf16.mxu0 0
    %623 = vmatpush1.bf16.msra.mxu0 0
    %624 = vmatprep.subr.bf16.mxu0 0
    %625 = vmatpush1.bf16.msra.mxu0 0
    %626 = vmatprep.subr.bf16.mxu0 0
    %627 = vmatpush1.bf16.msra.mxu0 0
    %628 = vmatprep.subr.bf16.mxu0 0
    %629 = vmatpush1.bf16.msra.mxu0 0
    %630 = vmatprep.subr.bf16.mxu0 0
    %631 = vmatpush1.bf16.msra.mxu0 0
    %632 = vmatprep.subr.bf16.mxu0 0
    %633 = vmatpush1.bf16.msra.mxu0 0
    %634 = vmatprep.subr.bf16.mxu0 0
    %635 = vmatpush1.bf16.msra.mxu0 0
    %636 = vmatprep.subr.bf16.mxu0 0
    %637 = vmatpush1.bf16.msra.mxu0 0
    %638 = vmatprep.mubr.bf16.mxu0 0
    %639 = vmatmul.mubr.bf16.gmra.mrb[0].mxu0 %v604
    %v640 = vpop.f32.mrb[0].mxu0
    %v641 = vadd.f32 %v598, %v640
    %v642 = vpop.f32.mrb[0].mxu0
    %v643 = vpop.f32.mrb[0].mxu0
    %v644 = vpop.f32.mrb[0].mxu0
    %645 = vdwg.mxu0
    %v646 = vadd.f32 %v641, %v114
    %v647 = vxor.u32 %v646, 2147483648
    %v648 = vmul.f32 %v647, 1.442695
    %v649 = vpow.pop %v648
    %v650 = vadd.f32 %v649, 1.0
    %v651 = vrcp.pop %v650
    %v652 = vmul.f32 1.0, %v651
    %v653 = vtanh.pop %v646
    %v654 = vmul.f32 %v652, %v547
    %656 = vrot.lane.b32.xlu0 %v653, 32
    %v657 = vpop.permute.xlu0 %656
    %v659 = vmul.f32 %v652, %v657
    %661 = vrot.lane.b32.xlu0 %v659, 32
    %v662 = vpop.permute.xlu0 %661
    %v664 = vadd.f32 %v654, %v662
    %v665 = vtanh.pop %v664
    %667 = vrot.lane.b32.xlu0 %v665, 32
    %v668 = vpop.permute.xlu0 %667
    %v670 = vmul.f32 %v652, %v668
    %s671 = scalar_lea.vmem [#allocation2], 5
    %v672 = vld [vmem:[%s671] sm:$0x1]
    %v673 = vpack.c.bf16 %v670, %v670
    %675 = vrot.lane.b32.xlu0 %v673, 64
    %v676 = vpop.permute.xlu0 %675
    %v678 = vsel %vm208, %v676, 0
    %680 = vmatprep.subr.bf16.mxu0 0
    %681 = vmatpush1.bf16.msra.mxu0 %v204
    %682 = vmatprep.subr.bf16.mxu0 0
    %683 = vmatpush1.bf16.msra.mxu0 %v205
    %684 = vmatprep.subr.bf16.mxu0 0
    %685 = vmatpush1.bf16.msra.mxu0 0
    %686 = vmatprep.subr.bf16.mxu0 0
    %687 = vmatpush1.bf16.msra.mxu0 0
    %688 = vmatprep.subr.bf16.mxu0 0
    %689 = vmatpush1.bf16.msra.mxu0 0
    %690 = vmatprep.subr.bf16.mxu0 0
    %691 = vmatpush1.bf16.msra.mxu0 0
    %692 = vmatprep.subr.bf16.mxu0 0
    %693 = vmatpush1.bf16.msra.mxu0 0
    %694 = vmatprep.subr.bf16.mxu0 0
    %695 = vmatpush1.bf16.msra.mxu0 0
    %696 = vmatprep.subr.bf16.mxu0 0
    %697 = vmatpush1.bf16.msra.mxu0 0
    %698 = vmatprep.subr.bf16.mxu0 0
    %699 = vmatpush1.bf16.msra.mxu0 0
    %700 = vmatprep.subr.bf16.mxu0 0
    %701 = vmatpush1.bf16.msra.mxu0 0
    %702 = vmatprep.subr.bf16.mxu0 0
    %703 = vmatpush1.bf16.msra.mxu0 0
    %704 = vmatprep.subr.bf16.mxu0 0
    %705 = vmatpush1.bf16.msra.mxu0 0
    %706 = vmatprep.subr.bf16.mxu0 0
    %707 = vmatpush1.bf16.msra.mxu0 0
    %708 = vmatprep.subr.bf16.mxu0 0
    %709 = vmatpush1.bf16.msra.mxu0 0
    %710 = vmatprep.subr.bf16.mxu0 0
    %711 = vmatpush1.bf16.msra.mxu0 0
    %712 = vmatprep.mubr.bf16.mxu0 0
    %713 = vmatmul.mubr.bf16.gmra.mrb[0].mxu0 %v678
    %v714 = vpop.f32.mrb[0].mxu0
    %v715 = vadd.f32 0.0, %v714
    %v716 = vpop.f32.mrb[0].mxu0
    %v717 = vpop.f32.mrb[0].mxu0
    %v718 = vpop.f32.mrb[0].mxu0
    %719 = vdwg.mxu0
    %v721 = vsel %vm122, %v672, 0
    %723 = vmatprep.subr.bf16.mxu0 0
    %724 = vmatpush1.bf16.msra.mxu0 %v120
    %725 = vmatprep.subr.bf16.mxu0 0
    %726 = vmatpush1.bf16.msra.mxu0 0
    %727 = vmatprep.subr.bf16.mxu0 0
    %728 = vmatpush1.bf16.msra.mxu0 0
    %729 = vmatprep.subr.bf16.mxu0 0
    %730 = vmatpush1.bf16.msra.mxu0 0
    %731 = vmatprep.subr.bf16.mxu0 0
    %732 = vmatpush1.bf16.msra.mxu0 0
    %733 = vmatprep.subr.bf16.mxu0 0
    %734 = vmatpush1.bf16.msra.mxu0 0
    %735 = vmatprep.subr.bf16.mxu0 0
    %736 = vmatpush1.bf16.msra.mxu0 0
    %737 = vmatprep.subr.bf16.mxu0 0
    %738 = vmatpush1.bf16.msra.mxu0 0
    %739 = vmatprep.subr.bf16.mxu0 0
    %740 = vmatpush1.bf16.msra.mxu0 0
    %741 = vmatprep.subr.bf16.mxu0 0
    %742 = vmatpush1.bf16.msra.mxu0 0
    %743 = vmatprep.subr.bf16.mxu0 0
    %744 = vmatpush1.bf16.msra.mxu0 0
    %745 = vmatprep.subr.bf16.mxu0 0
    %746 = vmatpush1.bf16.msra.mxu0 0
    %747 = vmatprep.subr.bf16.mxu0 0
    %748 = vmatpush1.bf16.msra.mxu0 0
    %749 = vmatprep.subr.bf16.mxu0 0
    %750 = vmatpush1.bf16.msra.mxu0 0
    %751 = vmatprep.subr.bf16.mxu0 0
    %752 = vmatpush1.bf16.msra.mxu0 0
    %753 = vmatprep.subr.bf16.mxu0 0
    %754 = vmatpush1.bf16.msra.mxu0 0
    %755 = vmatprep.mubr.bf16.mxu0 0
    %756 = vmatmul.mubr.bf16.gmra.mrb[0].mxu0 %v721
    %v757 = vpop.f32.mrb[0].mxu0
    %v758 = vadd.f32 %v715, %v757
    %v759 = vpop.f32.mrb[0].mxu0
    %v760 = vpop.f32.mrb[0].mxu0
    %v761 = vpop.f32.mrb[0].mxu0
    %762 = vdwg.mxu0
    %v763 = vadd.f32 %v758, %v114
    %v764 = vxor.u32 %v763, 2147483648
    %v765 = vmul.f32 %v764, 1.442695
    %v766 = vpow.pop %v765
    %v767 = vadd.f32 %v766, 1.0
    %v768 = vrcp.pop %v767
    %v769 = vmul.f32 1.0, %v768
    %v770 = vtanh.pop %v763
    %v771 = vmul.f32 %v769, %v664
    %773 = vrot.lane.b32.xlu0 %v770, 32
    %v774 = vpop.permute.xlu0 %773
    %v776 = vmul.f32 %v769, %v774
    %778 = vrot.lane.b32.xlu0 %v776, 32
    %v779 = vpop.permute.xlu0 %778
    %v781 = vadd.f32 %v771, %v779
    %v782 = vtanh.pop %v781
    %784 = vrot.lane.b32.xlu0 %v782, 32
    %v785 = vpop.permute.xlu0 %784
    %v787 = vmul.f32 %v769, %v785
    %s788 = scalar_lea.vmem [#allocation2], 6
    %v789 = vld [vmem:[%s788] sm:$0x1]
    %v790 = vpack.c.bf16 %v787, %v787
    %792 = vrot.lane.b32.xlu0 %v790, 64
    %v793 = vpop.permute.xlu0 %792
    %v795 = vsel %vm208, %v793, 0
    %797 = vmatprep.subr.bf16.mxu0 0
    %798 = vmatpush1.bf16.msra.mxu0 %v204
    %799 = vmatprep.subr.bf16.mxu0 0
    %800 = vmatpush1.bf16.msra.mxu0 %v205
    %801 = vmatprep.subr.bf16.mxu0 0
    %802 = vmatpush1.bf16.msra.mxu0 0
    %803 = vmatprep.subr.bf16.mxu0 0
    %804 = vmatpush1.bf16.msra.mxu0 0
    %805 = vmatprep.subr.bf16.mxu0 0
    %806 = vmatpush1.bf16.msra.mxu0 0
    %807 = vmatprep.subr.bf16.mxu0 0
    %808 = vmatpush1.bf16.msra.mxu0 0
    %809 = vmatprep.subr.bf16.mxu0 0
    %810 = vmatpush1.bf16.msra.mxu0 0
    %811 = vmatprep.subr.bf16.mxu0 0
    %812 = vmatpush1.bf16.msra.mxu0 0
    %813 = vmatprep.subr.bf16.mxu0 0
    %814 = vmatpush1.bf16.msra.mxu0 0
    %815 = vmatprep.subr.bf16.mxu0 0
    %816 = vmatpush1.bf16.msra.mxu0 0
    %817 = vmatprep.subr.bf16.mxu0 0
    %818 = vmatpush1.bf16.msra.mxu0 0
    %819 = vmatprep.subr.bf16.mxu0 0
    %820 = vmatpush1.bf16.msra.mxu0 0
    %821 = vmatprep.subr.bf16.mxu0 0
    %822 = vmatpush1.bf16.msra.mxu0 0
    %823 = vmatprep.subr.bf16.mxu0 0
    %824 = vmatpush1.bf16.msra.mxu0 0
    %825 = vmatprep.subr.bf16.mxu0 0
    %826 = vmatpush1.bf16.msra.mxu0 0
    %827 = vmatprep.subr.bf16.mxu0 0
    %828 = vmatpush1.bf16.msra.mxu0 0
    %829 = vmatprep.mubr.bf16.mxu0 0
    %830 = vmatmul.mubr.bf16.gmra.mrb[0].mxu0 %v795
    %v831 = vpop.f32.mrb[0].mxu0
    %v832 = vadd.f32 0.0, %v831
    %v833 = vpop.f32.mrb[0].mxu0
    %v834 = vpop.f32.mrb[0].mxu0
    %v835 = vpop.f32.mrb[0].mxu0
    %836 = vdwg.mxu0
    %v838 = vsel %vm122, %v789, 0
    %840 = vmatprep.subr.bf16.mxu0 0
    %841 = vmatpush1.bf16.msra.mxu0 %v120
    %842 = vmatprep.subr.bf16.mxu0 0
    %843 = vmatpush1.bf16.msra.mxu0 0
    %844 = vmatprep.subr.bf16.mxu0 0
    %845 = vmatpush1.bf16.msra.mxu0 0
    %846 = vmatprep.subr.bf16.mxu0 0
    %847 = vmatpush1.bf16.msra.mxu0 0
    %848 = vmatprep.subr.bf16.mxu0 0
    %849 = vmatpush1.bf16.msra.mxu0 0
    %850 = vmatprep.subr.bf16.mxu0 0
    %851 = vmatpush1.bf16.msra.mxu0 0
    %852 = vmatprep.subr.bf16.mxu0 0
    %853 = vmatpush1.bf16.msra.mxu0 0
    %854 = vmatprep.subr.bf16.mxu0 0
    %855 = vmatpush1.bf16.msra.mxu0 0
    %856 = vmatprep.subr.bf16.mxu0 0
    %857 = vmatpush1.bf16.msra.mxu0 0
    %858 = vmatprep.subr.bf16.mxu0 0
    %859 = vmatpush1.bf16.msra.mxu0 0
    %860 = vmatprep.subr.bf16.mxu0 0
    %861 = vmatpush1.bf16.msra.mxu0 0
    %862 = vmatprep.subr.bf16.mxu0 0
    %863 = vmatpush1.bf16.msra.mxu0 0
    %864 = vmatprep.subr.bf16.mxu0 0
    %865 = vmatpush1.bf16.msra.mxu0 0
    %866 = vmatprep.subr.bf16.mxu0 0
    %867 = vmatpush1.bf16.msra.mxu0 0
    %868 = vmatprep.subr.bf16.mxu0 0
    %869 = vmatpush1.bf16.msra.mxu0 0
    %870 = vmatprep.subr.bf16.mxu0 0
    %871 = vmatpush1.bf16.msra.mxu0 0
    %872 = vmatprep.mubr.bf16.mxu0 0
    %873 = vmatmul.mubr.bf16.gmra.mrb[0].mxu0 %v838
    %v874 = vpop.f32.mrb[0].mxu0
    %v875 = vadd.f32 %v832, %v874
    %v876 = vpop.f32.mrb[0].mxu0
    %v877 = vpop.f32.mrb[0].mxu0
    %v878 = vpop.f32.mrb[0].mxu0
    %879 = vdwg.mxu0
    %v880 = vadd.f32 %v875, %v114
    %v881 = vxor.u32 %v880, 2147483648
    %v882 = vmul.f32 %v881, 1.442695
    %v883 = vpow.pop %v882
    %v884 = vadd.f32 %v883, 1.0
    %v885 = vrcp.pop %v884
    %v886 = vmul.f32 1.0, %v885
    %v887 = vtanh.pop %v880
    %v888 = vmul.f32 %v886, %v781
    %890 = vrot.lane.b32.xlu0 %v887, 32
    %v891 = vpop.permute.xlu0 %890
    %v893 = vmul.f32 %v886, %v891
    %895 = vrot.lane.b32.xlu0 %v893, 32
    %v896 = vpop.permute.xlu0 %895
    %v898 = vadd.f32 %v888, %v896
    %v899 = vtanh.pop %v898
    %901 = vrot.lane.b32.xlu0 %v899, 32
    %v902 = vpop.permute.xlu0 %901
    %v904 = vmul.f32 %v886, %v902
    %s905 = scalar_lea.vmem [#allocation2], 7
    %v906 = vld [vmem:[%s905] sm:$0x1]
    %v907 = vpack.c.bf16 %v904, %v904
    %909 = vrot.lane.b32.xlu0 %v907, 64
    %v910 = vpop.permute.xlu0 %909
    %v912 = vsel %vm208, %v910, 0
    %914 = vmatprep.subr.bf16.mxu0 0
    %915 = vmatpush1.bf16.msra.mxu0 %v204
    %916 = vmatprep.subr.bf16.mxu0 0
    %917 = vmatpush1.bf16.msra.mxu0 %v205
    %918 = vmatprep.subr.bf16.mxu0 0
    %919 = vmatpush1.bf16.msra.mxu0 0
    %920 = vmatprep.subr.bf16.mxu0 0
    %921 = vmatpush1.bf16.msra.mxu0 0
    %922 = vmatprep.subr.bf16.mxu0 0
    %923 = vmatpush1.bf16.msra.mxu0 0
    %924 = vmatprep.subr.bf16.mxu0 0
    %925 = vmatpush1.bf16.msra.mxu0 0
    %926 = vmatprep.subr.bf16.mxu0 0
    %927 = vmatpush1.bf16.msra.mxu0 0
    %928 = vmatprep.subr.bf16.mxu0 0
    %929 = vmatpush1.bf16.msra.mxu0 0
    %930 = vmatprep.subr.bf16.mxu0 0
    %931 = vmatpush1.bf16.msra.mxu0 0
    %932 = vmatprep.subr.bf16.mxu0 0
    %933 = vmatpush1.bf16.msra.mxu0 0
    %934 = vmatprep.subr.bf16.mxu0 0
    %935 = vmatpush1.bf16.msra.mxu0 0
    %936 = vmatprep.subr.bf16.mxu0 0
    %937 = vmatpush1.bf16.msra.mxu0 0
    %938 = vmatprep.subr.bf16.mxu0 0
    %939 = vmatpush1.bf16.msra.mxu0 0
    %940 = vmatprep.subr.bf16.mxu0 0
    %941 = vmatpush1.bf16.msra.mxu0 0
    %942 = vmatprep.subr.bf16.mxu0 0
    %943 = vmatpush1.bf16.msra.mxu0 0
    %944 = vmatprep.subr.bf16.mxu0 0
    %945 = vmatpush1.bf16.msra.mxu0 0
    %946 = vmatprep.mubr.bf16.mxu0 0
    %947 = vmatmul.mubr.bf16.gmra.mrb[0].mxu0 %v912
    %v948 = vpop.f32.mrb[0].mxu0
    %v949 = vadd.f32 0.0, %v948
    %v950 = vpop.f32.mrb[0].mxu0
    %v951 = vpop.f32.mrb[0].mxu0
    %v952 = vpop.f32.mrb[0].mxu0
    %953 = vdwg.mxu0
    %v955 = vsel %vm122, %v906, 0
    %957 = vmatprep.subr.bf16.mxu0 0
    %958 = vmatpush1.bf16.msra.mxu0 %v120
    %959 = vmatprep.subr.bf16.mxu0 0
    %960 = vmatpush1.bf16.msra.mxu0 0
    %961 = vmatprep.subr.bf16.mxu0 0
    %962 = vmatpush1.bf16.msra.mxu0 0
    %963 = vmatprep.subr.bf16.mxu0 0
    %964 = vmatpush1.bf16.msra.mxu0 0
    %965 = vmatprep.subr.bf16.mxu0 0
    %966 = vmatpush1.bf16.msra.mxu0 0
    %967 = vmatprep.subr.bf16.mxu0 0
    %968 = vmatpush1.bf16.msra.mxu0 0
    %969 = vmatprep.subr.bf16.mxu0 0
    %970 = vmatpush1.bf16.msra.mxu0 0
    %971 = vmatprep.subr.bf16.mxu0 0
    %972 = vmatpush1.bf16.msra.mxu0 0
    %973 = vmatprep.subr.bf16.mxu0 0
    %974 = vmatpush1.bf16.msra.mxu0 0
    %975 = vmatprep.subr.bf16.mxu0 0
    %976 = vmatpush1.bf16.msra.mxu0 0
    %977 = vmatprep.subr.bf16.mxu0 0
    %978 = vmatpush1.bf16.msra.mxu0 0
    %979 = vmatprep.subr.bf16.mxu0 0
    %980 = vmatpush1.bf16.msra.mxu0 0
    %981 = vmatprep.subr.bf16.mxu0 0
    %982 = vmatpush1.bf16.msra.mxu0 0
    %983 = vmatprep.subr.bf16.mxu0 0
    %984 = vmatpush1.bf16.msra.mxu0 0
    %985 = vmatprep.subr.bf16.mxu0 0
    %986 = vmatpush1.bf16.msra.mxu0 0
    %987 = vmatprep.subr.bf16.mxu0 0
    %988 = vmatpush1.bf16.msra.mxu0 0
    %989 = vmatprep.mubr.bf16.mxu0 0
    %990 = vmatmul.mubr.bf16.gmra.mrb[0].mxu0 %v955
    %v991 = vpop.f32.mrb[0].mxu0
    %v992 = vadd.f32 %v949, %v991
    %v993 = vpop.f32.mrb[0].mxu0
    %v994 = vpop.f32.mrb[0].mxu0
    %v995 = vpop.f32.mrb[0].mxu0
    %996 = vdwg.mxu0
    %v997 = vadd.f32 %v992, %v114
    %v998 = vxor.u32 %v997, 2147483648
    %v999 = vmul.f32 %v998, 1.442695
    %v1000 = vpow.pop %v999
    %v1001 = vadd.f32 %v1000, 1.0
    %v1002 = vrcp.pop %v1001
    %v1003 = vmul.f32 1.0, %v1002
    %v1004 = vtanh.pop %v997
    %v1005 = vmul.f32 %v1003, %v898
    %1007 = vrot.lane.b32.xlu0 %v1004, 32
    %v1008 = vpop.permute.xlu0 %1007
    %v1010 = vmul.f32 %v1003, %v1008
    %1012 = vrot.lane.b32.xlu0 %v1010, 32
    %v1013 = vpop.permute.xlu0 %1012
    %v1015 = vadd.f32 %v1005, %v1013
    %v1016 = vtanh.pop %v1015
    %1018 = vrot.lane.b32.xlu0 %v1016, 32
    %v1019 = vpop.permute.xlu0 %1018
    %v1021 = vmul.f32 %v1003, %v1019
    %v1022 = vld [vmem:[#allocation8] sm:$0xf]
    %v1023 = vld [vmem:[#allocation8 + $0x4] sm:$0xf]
    %v1024 = vld [vmem:[%s5] sm:$0x1]
    %v1026 = vlaneseq
    %v1027 = vshrl.u32 %v1026, 7
    %v1028 = vsub.s32 0, %v1027
    %v1029 = vrot.slane %v1024, %v1028
    %v1033 = vunpack.c.l.b16 %v1022
    %v1034 = vunpack.c.l.b16 %v1023
    %v1035 = vpack.c.b16 %v1034, %v1033
    %1037 = vmatprep.subr.bf16.mxu0 0
    %1038 = vmatpush1.bf16.msra.mxu0 %v1035
    %1039 = vmatprep.subr.bf16.mxu0 0
    %1040 = vmatpush1.bf16.msra.mxu0 0
    %1041 = vmatprep.subr.bf16.mxu0 0
    %1042 = vmatpush1.bf16.msra.mxu0 0
    %1043 = vmatprep.subr.bf16.mxu0 0
    %1044 = vmatpush1.bf16.msra.mxu0 0
    %1045 = vmatprep.subr.bf16.mxu0 0
    %1046 = vmatpush1.bf16.msra.mxu0 0
    %1047 = vmatprep.subr.bf16.mxu0 0
    %1048 = vmatpush1.bf16.msra.mxu0 0
    %1049 = vmatprep.subr.bf16.mxu0 0
    %1050 = vmatpush1.bf16.msra.mxu0 0
    %1051 = vmatprep.subr.bf16.mxu0 0
    %1052 = vmatpush1.bf16.msra.mxu0 0
    %1053 = vmatprep.subr.bf16.mxu0 0
    %1054 = vmatpush1.bf16.msra.mxu0 0
    %1055 = vmatprep.subr.bf16.mxu0 0
    %1056 = vmatpush1.bf16.msra.mxu0 0
    %1057 = vmatprep.subr.bf16.mxu0 0
    %1058 = vmatpush1.bf16.msra.mxu0 0
    %1059 = vmatprep.subr.bf16.mxu0 0
    %1060 = vmatpush1.bf16.msra.mxu0 0
    %1061 = vmatprep.subr.bf16.mxu0 0
    %1062 = vmatpush1.bf16.msra.mxu0 0
    %1063 = vmatprep.subr.bf16.mxu0 0
    %1064 = vmatpush1.bf16.msra.mxu0 0
    %1065 = vmatprep.subr.bf16.mxu0 0
    %1066 = vmatpush1.bf16.msra.mxu0 0
    %1067 = vmatprep.subr.bf16.mxu0 0
    %1068 = vmatpush1.bf16.msra.mxu0 0
    %1069 = vmatprep.mubr.bf16.mxu0 0
    %1070 = vmatmul.mubr.bf16.gmra.mrb[0].mxu0 %v955
    %v1071 = vpop.f32.mrb[0].mxu0
    %v1072 = vadd.f32 %v1029, %v1071
    %v1073 = vpop.f32.mrb[0].mxu0
    %v1074 = vpop.f32.mrb[0].mxu0
    %v1075 = vpop.f32.mrb[0].mxu0
    %1076 = vdwg.mxu0
    %v1077 = vxor.u32 %v1072, 2147483648
    %v1078 = vmul.f32 %v1077, 1.442695
    %v1079 = vpow.pop %v1078
    %v1080 = vadd.f32 %v1079, 1.0
    %v1081 = vrcp.pop %v1080
    %v1082 = vmul.f32 1.0, %v1081
    %v1083 = vtanh.pop %v1072
    %v1084 = vmul.f32 %v1082, 0.0
    %1086 = vrot.lane.b32.xlu0 %v1083, 32
    %v1087 = vpop.permute.xlu0 %1086
    %v1089 = vmul.f32 %v1082, %v1087
    %1091 = vrot.lane.b32.xlu0 %v1089, 32
    %v1092 = vpop.permute.xlu0 %1091
    %v1094 = vadd.f32 %v1084, %v1092
    %v1095 = vtanh.pop %v1094
    %1097 = vrot.lane.b32.xlu0 %v1095, 32
    %v1098 = vpop.permute.xlu0 %1097
    %v1100 = vmul.f32 %v1082, %v1098
    %v1101 = vpack.c.bf16 %v1021, %v1021
    %v1102 = vld [vmem:[%s6] sm:$0xf]
    %v1103 = vld [vmem:[%s6 + $0x4] sm:$0xf]
    %v1104 = vld [vmem:[%s6 + $0x8] sm:$0xf]
    %v1105 = vld [vmem:[%s6 + $0xc] sm:$0xf]
    %v1106 = vpack.c.bf16 %v1100, %v1100
    %v1107 = vld [vmem:[#allocation10] sm:$0xf]
    %v1108 = vld [vmem:[#allocation10 + $0x4] sm:$0xf]
    %v1109 = vld [vmem:[#allocation10 + $0x8] sm:$0xf]
    %v1110 = vld [vmem:[#allocation10 + $0xc] sm:$0xf]
    %1112 = vrot.lane.b32.xlu0 %v1106, 64
    %v1113 = vpop.permute.xlu0 %1112
    %v1118 = vunpack.c.l.b16 %v1107
    %v1119 = vunpack.c.l.b16 %v1108
    %v1120 = vunpack.c.l.b16 %v1109
    %v1121 = vunpack.c.l.b16 %v1110
    %v1122 = vpack.c.b16 %v1119, %v1118
    %v1123 = vpack.c.b16 %v1121, %v1120
    %v1127 = vsel %vm208, %v1113, 0
    %1129 = vmatprep.subr.bf16.mxu0 0
    %1130 = vmatpush1.bf16.msra.mxu0 %v1122
    %1131 = vmatprep.subr.bf16.mxu0 0
    %1132 = vmatpush1.bf16.msra.mxu0 %v1123
    %1133 = vmatprep.subr.bf16.mxu0 0
    %1134 = vmatpush1.bf16.msra.mxu0 0
    %1135 = vmatprep.subr.bf16.mxu0 0
    %1136 = vmatpush1.bf16.msra.mxu0 0
    %1137 = vmatprep.subr.bf16.mxu0 0
    %1138 = vmatpush1.bf16.msra.mxu0 0
    %1139 = vmatprep.subr.bf16.mxu0 0
    %1140 = vmatpush1.bf16.msra.mxu0 0
    %1141 = vmatprep.subr.bf16.mxu0 0
    %1142 = vmatpush1.bf16.msra.mxu0 0
    %1143 = vmatprep.subr.bf16.mxu0 0
    %1144 = vmatpush1.bf16.msra.mxu0 0
    %1145 = vmatprep.subr.bf16.mxu0 0
    %1146 = vmatpush1.bf16.msra.mxu0 0
    %1147 = vmatprep.subr.bf16.mxu0 0
    %1148 = vmatpush1.bf16.msra.mxu0 0
    %1149 = vmatprep.subr.bf16.mxu0 0
    %1150 = vmatpush1.bf16.msra.mxu0 0
    %1151 = vmatprep.subr.bf16.mxu0 0
    %1152 = vmatpush1.bf16.msra.mxu0 0
    %1153 = vmatprep.subr.bf16.mxu0 0
    %1154 = vmatpush1.bf16.msra.mxu0 0
    %1155 = vmatprep.subr.bf16.mxu0 0
    %1156 = vmatpush1.bf16.msra.mxu0 0
    %1157 = vmatprep.subr.bf16.mxu0 0
    %1158 = vmatpush1.bf16.msra.mxu0 0
    %1159 = vmatprep.subr.bf16.mxu0 0
    %1160 = vmatpush1.bf16.msra.mxu0 0
    %1161 = vmatprep.mubr.bf16.mxu0 0
    %1162 = vmatmul.mubr.bf16.gmra.mrb[0].mxu0 %v1127
    %v1163 = vpop.f32.mrb[0].mxu0
    %v1164 = vadd.f32 0.0, %v1163
    %v1165 = vpop.f32.mrb[0].mxu0
    %v1166 = vpop.f32.mrb[0].mxu0
    %v1167 = vpop.f32.mrb[0].mxu0
    %1168 = vdwg.mxu0
    %1170 = vrot.lane.b32.xlu0 %v1101, 64
    %v1171 = vpop.permute.xlu0 %1170
    %v1176 = vunpack.c.l.b16 %v1102
    %v1177 = vunpack.c.l.b16 %v1103
    %v1178 = vunpack.c.l.b16 %v1104
    %v1179 = vunpack.c.l.b16 %v1105
    %v1180 = vpack.c.b16 %v1177, %v1176
    %v1181 = vpack.c.b16 %v1179, %v1178
    %v1185 = vsel %vm208, %v1171, 0
    %1187 = vmatprep.subr.bf16.mxu0 0
    %1188 = vmatpush1.bf16.msra.mxu0 %v1180
    %1189 = vmatprep.subr.bf16.mxu0 0
    %1190 = vmatpush1.bf16.msra.mxu0 %v1181
    %1191 = vmatprep.subr.bf16.mxu0 0
    %1192 = vmatpush1.bf16.msra.mxu0 0
    %1193 = vmatprep.subr.bf16.mxu0 0
    %1194 = vmatpush1.bf16.msra.mxu0 0
    %1195 = vmatprep.subr.bf16.mxu0 0
    %1196 = vmatpush1.bf16.msra.mxu0 0
    %1197 = vmatprep.subr.bf16.mxu0 0
    %1198 = vmatpush1.bf16.msra.mxu0 0
    %1199 = vmatprep.subr.bf16.mxu0 0
    %1200 = vmatpush1.bf16.msra.mxu0 0
    %1201 = vmatprep.subr.bf16.mxu0 0
    %1202 = vmatpush1.bf16.msra.mxu0 0
    %1203 = vmatprep.subr.bf16.mxu0 0
    %1204 = vmatpush1.bf16.msra.mxu0 0
    %1205 = vmatprep.subr.bf16.mxu0 0
    %1206 = vmatpush1.bf16.msra.mxu0 0
    %1207 = vmatprep.subr.bf16.mxu0 0
    %1208 = vmatpush1.bf16.msra.mxu0 0
    %1209 = vmatprep.subr.bf16.mxu0 0
    %1210 = vmatpush1.bf16.msra.mxu0 0
    %1211 = vmatprep.subr.bf16.mxu0 0
    %1212 = vmatpush1.bf16.msra.mxu0 0
    %1213 = vmatprep.subr.bf16.mxu0 0
    %1214 = vmatpush1.bf16.msra.mxu0 0
    %1215 = vmatprep.subr.bf16.mxu0 0
    %1216 = vmatpush1.bf16.msra.mxu0 0
    %1217 = vmatprep.subr.bf16.mxu0 0
    %1218 = vmatpush1.bf16.msra.mxu0 0
    %1219 = vmatprep.mubr.bf16.mxu0 0
    %1220 = vmatmul.mubr.bf16.gmra.mrb[0].mxu0 %v1185
    %v1221 = vpop.f32.mrb[0].mxu0
    %v1222 = vadd.f32 %v1164, %v1221
    %v1223 = vpop.f32.mrb[0].mxu0
    %v1224 = vpop.f32.mrb[0].mxu0
    %v1225 = vpop.f32.mrb[0].mxu0
    %1226 = vdwg.mxu0
    %v1227 = vld [vmem:[%s8] sm:$0x1]
    %v1229 = vlaneseq
    %v1230 = vshrl.u32 %v1229, 7
    %v1231 = vsub.s32 0, %v1230
    %v1232 = vrot.slane %v1227, %v1231
    %v1234 = vadd.f32 %v1222, %v1232
    %1235 = vst [vmem:[#allocation11] sm:$0x3] %v1234
    // Predicated region
    $region58: #{tpu_custom_call.1} parent=1 // pred_check
      _
    $region59: #{tpu_custom_call.1} parent=1 // pred_check_branch
      %1237 = sbr.rel (0) target = $region61
    $region60: #{tpu_custom_call.1} parent=1 // pred_region
      %s1239 = ssub.s32 32, 32
      %1240 = vsyncadd [#allocation4], %s1239
      %s1242 = sshll.u32 [#allocation11], 4
      %s1243 = int_to_ptr.vmem [resolvable:$true] %s1242
      %1245 = dma.vmem_to_hbm [thread:$0]  %s1243, 32, %s9, [#allocation4]
    $region61: #{tpu_custom_call.1} parent=1 // pred_fallthru
      _
    // Predicated region
    $region62: #{tpu_custom_call.1} parent=1 // pred_check
      _
    $region63: #{tpu_custom_call.1} parent=1 // pred_check_branch
      %1247 = sbr.rel (0) target = $region65
    $region64: #{tpu_custom_call.1} parent=1 // pred_region
      %1248 = dma.done [#allocation4], 32
    $region65: #{tpu_custom_call.1} parent=1 // pred_fallthru
      _
    %1249 = vsyncpa [#allocation3], 1
    %1250 = vsyncpa [#allocation6], 1
    %1251 = vsyncpa [#allocation9], 1
    %1252 = vsyncpa [#allocation4], 1

</llo_original>
